<compile_context>
chip_gen: v6e
topology: v6e:2x2x1
jax: 0.10.0
libtpu: 0.0.40
codegen_flags: <defaults>
</compile_context>

<pallas_src>
import functools

import jax
import jax.numpy as jnp
from jax.experimental import pallas as pl
from jax.experimental.pallas import tpu as pltpu


def _layernorm(x, w, b, eps=1e-5):
    mu = jnp.mean(x, axis=-1, keepdims=True)
    var = jnp.mean((x - mu) ** 2, axis=-1, keepdims=True)
    return (x - mu) * jax.lax.rsqrt(var + eps) * w + b


def _gelu_exact(x):
    # F.gelu default = exact erf-based gelu (kept exact for parity with PyTorch)
    return 0.5 * x * (1.0 + jax.lax.erf(x / jnp.sqrt(2.0).astype(x.dtype)))


def encoder_layer_kernel(
    src_ref,                      # (Bt, N, C)  f32
    ln0_w_ref, ln0_b_ref,         # (1, C)      f32
    qkv_w_ref,                    # (C, 3C)     bf16   (x @ W layout)
    proj_w_ref, proj_b_ref,       # (C, C) bf16, (1, C) f32
    ln1_w_ref, ln1_b_ref,         # (1, C)      f32
    lin1_w_ref, lin1_b_ref,       # (C, F) bf16, (1, F) f32
    lin2_w_ref, lin2_b_ref,       # (F, C) bf16, (1, C) f32
    out_ref,                      # (Bt, N, C)  f32
    *, num_heads,
):
    Bt, N, C = src_ref.shape
    H = num_heads
    hd = C // H
    scale = hd ** (-0.5)
    bf = jnp.bfloat16

    # Flatten batch tile into the matmul M dimension.
    x = src_ref[...].reshape(Bt * N, C)                       # (M, C) f32

    # Hoisted parameter reads (avoid re-emitting broadcasts per use).
    ln0_w = ln0_w_ref[0]
    ln0_b = ln0_b_ref[0]
    ln1_w = ln1_w_ref[0]
    ln1_b = ln1_b_ref[0]
    qkv_w = qkv_w_ref[...]
    proj_w = proj_w_ref[...]
    proj_b = proj_b_ref[0]
    lin1_w = lin1_w_ref[...]
    lin1_b = lin1_b_ref[0]
    lin2_w = lin2_w_ref[...]
    lin2_b = lin2_b_ref[0]

    # --- pre_norm + QKV projection (bf16 operands, f32 accumulation) ---
    y = _layernorm(x, ln0_w, ln0_b)
    qkv = jnp.dot(y.astype(bf), qkv_w, preferred_element_type=jnp.float32)   # (M, 3C)
    q = qkv[:, 0 * C:1 * C]
    k = qkv[:, 1 * C:2 * C]
    v = qkv[:, 2 * C:3 * C]

    # --- self-attention: per-head (short static loop), batched over Bt ---
    # The output projection is accumulated head-by-head, which is
    # mathematically identical to concat(heads) @ proj_w but avoids the
    # concatenate relayout entirely.
    proj_acc = jnp.zeros((Bt * N, C), jnp.float32)
    for h in range(H):
        sl = slice(h * hd, (h + 1) * hd)
        qh = q[:, sl].reshape(Bt, N, hd).astype(bf)
        kh = k[:, sl].reshape(Bt, N, hd).astype(bf)
        vh = v[:, sl].reshape(Bt, N, hd).astype(bf)

        s = jnp.einsum("bnd,bmd->bnm", qh, kh,
                       preferred_element_type=jnp.float32) * scale          # (Bt,N,N) f32
        s = s - jnp.max(s, axis=-1, keepdims=True)
        p = jnp.exp(s)
        # EUP approximate reciprocal instead of a VALU divide.
        p = p * pl.reciprocal(jnp.sum(p, axis=-1, keepdims=True), approx=True)

        o = jnp.einsum("bnm,bmd->bnd", p.astype(bf), vh,
                       preferred_element_type=jnp.float32)                  # (Bt,N,hd)
        o = o.reshape(Bt * N, hd).astype(bf)
        proj_acc = proj_acc + jnp.dot(o, proj_w[sl, :],
                                      preferred_element_type=jnp.float32)

    proj = proj_acc + proj_b

    # residual 1 (DropPath / Dropout are identity in eval mode)
    src1 = x + proj

    # --- norm1 + MLP ---
    src1n = _layernorm(src1, ln1_w, ln1_b)
    h1 = jnp.dot(src1n.astype(bf), lin1_w,
                 preferred_element_type=jnp.float32) + lin1_b
    h1 = _gelu_exact(h1)
    h2 = jnp.dot(h1.astype(bf), lin2_w,
                 preferred_element_type=jnp.float32) + lin2_b

    out = src1n + h2
    out_ref[...] = out.reshape(Bt, N, C).astype(out_ref.dtype)


def _choose_batch_tile(B, N):
    """Largest divisor Bt of B such that the folded matmul M = Bt*N stays
    within a VMEM-friendly bound.  Pushes M toward >=128 when B allows it."""
    best = 1
    for bt in range(1, B + 1):
        if B % bt == 0 and bt * N <= 2048:
            best = bt
    return best


def transformer_encoder_layer(src, params, num_heads):
    B, N, C = src.shape
    F = params["lin1_w"].shape[1]
    Bt = _choose_batch_tile(B, N)
    grid = (B // Bt,)

    # Weights shipped as bf16 (MXU operands); biases / LN params stay f32.
    qkv_w = params["qkv_w"].astype(jnp.bfloat16)
    proj_w = params["proj_w"].astype(jnp.bfloat16)
    lin1_w = params["lin1_w"].astype(jnp.bfloat16)
    lin2_w = params["lin2_w"].astype(jnp.bfloat16)

    rep = lambda shape: pl.BlockSpec(shape, lambda b: (0, 0))
    kernel = functools.partial(encoder_layer_kernel, num_heads=num_heads)

    return pl.pallas_call(
        kernel,
        out_shape=jax.ShapeDtypeStruct((B, N, C), src.dtype),
        grid=grid,
        in_specs=[
            pl.BlockSpec((Bt, N, C), lambda b: (b, 0, 0)),   # src tile
            rep((1, C)), rep((1, C)),                        # ln0 w, b
            rep((C, 3 * C)),                                 # qkv_w
            rep((C, C)), rep((1, C)),                        # proj w, b
            rep((1, C)), rep((1, C)),                        # ln1 w, b
            rep((C, F)), rep((1, F)),                        # lin1 w, b
            rep((F, C)), rep((1, C)),                        # lin2 w, b
        ],
        out_specs=pl.BlockSpec((Bt, N, C), lambda b: (b, 0, 0)),
        compiler_params=pltpu.CompilerParams(
            dimension_semantics=("parallel",)),
    )(
        src,
        params["ln0_w"], params["ln0_b"],
        qkv_w,
        proj_w, params["proj_b"],
        params["ln1_w"], params["ln1_b"],
        lin1_w, params["lin1_b"],
        lin2_w, params["lin2_b"],
    )


def reference_forward(src, params, num_heads):
    """Pure-JAX reference mirroring the kernel's mixed-precision policy:
    bf16 MXU operands, f32 accumulation, f32 LayerNorm/softmax/GELU."""
    B, N, C = src.shape
    H = num_heads
    hd = C // H
    scale = hd ** (-0.5)
    bf = jnp.bfloat16

    y = _layernorm(src, params["ln0_w"][0], params["ln0_b"][0])
    qkv = jnp.dot(y.astype(bf), params["qkv_w"].astype(bf),
                  preferred_element_type=jnp.float32)                 # (B, N, 3C)
    qkv = qkv.reshape(B, N, 3, H, hd).transpose(2, 0, 3, 1, 4)
    q, k, v = qkv[0], qkv[1], qkv[2]                                  # (B, H, N, hd)
    s = jnp.einsum("bhnd,bhmd->bhnm", q.astype(bf), k.astype(bf),
                   preferred_element_type=jnp.float32) * scale
    p = jax.nn.softmax(s, axis=-1)
    o = jnp.einsum("bhnm,bhmd->bhnd", p.astype(bf), v.astype(bf),
                   preferred_element_type=jnp.float32)
    o = o.transpose(0, 2, 1, 3).reshape(B, N, C)
    proj = jnp.dot(o.astype(bf), params["proj_w"].astype(bf),
                   preferred_element_type=jnp.float32) + params["proj_b"][0]

    src1 = src + proj
    src1n = _layernorm(src1, params["ln1_w"][0], params["ln1_b"][0])
    h1 = jnp.dot(src1n.astype(bf), params["lin1_w"].astype(bf),
                 preferred_element_type=jnp.float32) + params["lin1_b"][0]
    h1 = _gelu_exact(h1)
    h2 = jnp.dot(h1.astype(bf), params["lin2_w"].astype(bf),
                 preferred_element_type=jnp.float32) + params["lin2_b"][0]
    return src1n + h2


def make_params(key, d_model, dim_feedforward):
    ks = jax.random.split(key, 8)
    s = 0.02
    return {
        "ln0_w": jnp.ones((1, d_model), jnp.float32),
        "ln0_b": jnp.zeros((1, d_model), jnp.float32),
        # stored as (in, out) so the kernel does x @ W ; qkv has no bias (CCT)
        "qkv_w": s * jax.random.normal(ks[0], (d_model, 3 * d_model), jnp.float32),
        "proj_w": s * jax.random.normal(ks[1], (d_model, d_model), jnp.float32),
        "proj_b": s * jax.random.normal(ks[2], (1, d_model), jnp.float32),
        "ln1_w": jnp.ones((1, d_model), jnp.float32),
        "ln1_b": jnp.zeros((1, d_model), jnp.float32),
        "lin1_w": s * jax.random.normal(ks[3], (d_model, dim_feedforward), jnp.float32),
        "lin1_b": s * jax.random.normal(ks[4], (1, dim_feedforward), jnp.float32),
        "lin2_w": s * jax.random.normal(ks[5], (dim_feedforward, d_model), jnp.float32),
        "lin2_b": s * jax.random.normal(ks[6], (1, d_model), jnp.float32),
    }


if __name__ == "__main__":
    B, N, d_model, nhead, dim_ff = 2, 8, 32, 4, 64

    key = jax.random.PRNGKey(0)
    k_src, k_par = jax.random.split(key)
    src = jax.random.normal(k_src, (B, N, d_model), jnp.float32)
    params = make_params(k_par, d_model, dim_ff)

    out = transformer_encoder_layer(src, params, nhead)
    out = jax.block_until_ready(out)

    ref = reference_forward(src, params, nhead)
    assert out.shape == (B, N, d_model)
    max_err = float(jnp.max(jnp.abs(out - ref)))
    assert jnp.allclose(out, ref, atol=5e-3, rtol=5e-3), (
        f"mismatch vs. JAX reference, max abs err {max_err}")

    print("KERNEL_OK")
</pallas_src>

<mosaic_0001>
module attributes {stable_mosaic.version = 11 : i64} {
  func.func @encoder_layer_kernel(%arg0: i32, %arg1: memref<2x8x32xf32, #tpu.memory_space<vmem>>, %arg2: memref<1x32xf32, #tpu.memory_space<vmem>>, %arg3: memref<1x32xf32, #tpu.memory_space<vmem>>, %arg4: memref<32x96xbf16, #tpu.memory_space<vmem>>, %arg5: memref<32x32xbf16, #tpu.memory_space<vmem>>, %arg6: memref<1x32xf32, #tpu.memory_space<vmem>>, %arg7: memref<1x32xf32, #tpu.memory_space<vmem>>, %arg8: memref<1x32xf32, #tpu.memory_space<vmem>>, %arg9: memref<32x64xbf16, #tpu.memory_space<vmem>>, %arg10: memref<1x64xf32, #tpu.memory_space<vmem>>, %arg11: memref<64x32xbf16, #tpu.memory_space<vmem>>, %arg12: memref<1x32xf32, #tpu.memory_space<vmem>>, %arg13: memref<2x8x32xf32, #tpu.memory_space<vmem>>) attributes {dimension_semantics = [#tpu.dimension_semantics<parallel>], iteration_bounds = array<i64: 1>, scalar_prefetch = 0 : i64, scratch_operands = 0 : i64, tpu.core_type = #tpu.core_type<tc>, window_params = [{transform_indices = @transform_0, window_bounds = array<i64: 2, 8, 32>}, {pipeline_mode = #tpu.pipeline_mode<synchronous>, transform_indices = @transform_1, window_bounds = array<i64: 1, 32>}, {pipeline_mode = #tpu.pipeline_mode<synchronous>, transform_indices = @transform_2, window_bounds = array<i64: 1, 32>}, {pipeline_mode = #tpu.pipeline_mode<synchronous>, transform_indices = @transform_3, window_bounds = array<i64: 32, 96>}, {pipeline_mode = #tpu.pipeline_mode<synchronous>, transform_indices = @transform_4, window_bounds = array<i64: 32, 32>}, {pipeline_mode = #tpu.pipeline_mode<synchronous>, transform_indices = @transform_5, window_bounds = array<i64: 1, 32>}, {pipeline_mode = #tpu.pipeline_mode<synchronous>, transform_indices = @transform_6, window_bounds = array<i64: 1, 32>}, {pipeline_mode = #tpu.pipeline_mode<synchronous>, transform_indices = @transform_7, window_bounds = array<i64: 1, 32>}, {pipeline_mode = #tpu.pipeline_mode<synchronous>, transform_indices = @transform_8, window_bounds = array<i64: 32, 64>}, {pipeline_mode = #tpu.pipeline_mode<synchronous>, transform_indices = @transform_9, window_bounds = array<i64: 1, 64>}, {pipeline_mode = #tpu.pipeline_mode<synchronous>, transform_indices = @transform_10, window_bounds = array<i64: 64, 32>}, {pipeline_mode = #tpu.pipeline_mode<synchronous>, transform_indices = @transform_11, window_bounds = array<i64: 1, 32>}, {transform_indices = @transform_12, window_bounds = array<i64: 2, 8, 32>}]} {
    %c0 = arith.constant 0 : index
    %c0_0 = arith.constant 0 : index
    %c0_1 = arith.constant 0 : index
    %0 = vector.load %arg1[%c0, %c0_0, %c0_1] : memref<2x8x32xf32, #tpu.memory_space<vmem>>, vector<2x8x32xf32>
    %1 = vector.shape_cast %0 : vector<2x8x32xf32> to vector<16x32xf32>
    %c0_2 = arith.constant 0 : index
    %c0_3 = arith.constant 0 : index
    %2 = vector.load %arg2[%c0_2, %c0_3] : memref<1x32xf32, #tpu.memory_space<vmem>>, vector<1x32xf32>
    %3 = vector.shape_cast %2 : vector<1x32xf32> to vector<32xf32>
    %c0_4 = arith.constant 0 : index
    %c0_5 = arith.constant 0 : index
    %4 = vector.load %arg3[%c0_4, %c0_5] : memref<1x32xf32, #tpu.memory_space<vmem>>, vector<1x32xf32>
    %5 = vector.shape_cast %4 : vector<1x32xf32> to vector<32xf32>
    %c0_6 = arith.constant 0 : index
    %c0_7 = arith.constant 0 : index
    %6 = vector.load %arg7[%c0_6, %c0_7] : memref<1x32xf32, #tpu.memory_space<vmem>>, vector<1x32xf32>
    %7 = vector.shape_cast %6 : vector<1x32xf32> to vector<32xf32>
    %c0_8 = arith.constant 0 : index
    %c0_9 = arith.constant 0 : index
    %8 = vector.load %arg8[%c0_8, %c0_9] : memref<1x32xf32, #tpu.memory_space<vmem>>, vector<1x32xf32>
    %9 = vector.shape_cast %8 : vector<1x32xf32> to vector<32xf32>
    %c0_10 = arith.constant 0 : index
    %c0_11 = arith.constant 0 : index
    %10 = vector.load %arg4[%c0_10, %c0_11] : memref<32x96xbf16, #tpu.memory_space<vmem>>, vector<32x96xbf16>
    %c0_12 = arith.constant 0 : index
    %c0_13 = arith.constant 0 : index
    %11 = vector.load %arg5[%c0_12, %c0_13] : memref<32x32xbf16, #tpu.memory_space<vmem>>, vector<32x32xbf16>
    %c0_14 = arith.constant 0 : index
    %c0_15 = arith.constant 0 : index
    %12 = vector.load %arg6[%c0_14, %c0_15] : memref<1x32xf32, #tpu.memory_space<vmem>>, vector<1x32xf32>
    %13 = vector.shape_cast %12 : vector<1x32xf32> to vector<32xf32>
    %c0_16 = arith.constant 0 : index
    %c0_17 = arith.constant 0 : index
    %14 = vector.load %arg9[%c0_16, %c0_17] : memref<32x64xbf16, #tpu.memory_space<vmem>>, vector<32x64xbf16>
    %c0_18 = arith.constant 0 : index
    %c0_19 = arith.constant 0 : index
    %15 = vector.load %arg10[%c0_18, %c0_19] : memref<1x64xf32, #tpu.memory_space<vmem>>, vector<1x64xf32>
    %16 = vector.shape_cast %15 : vector<1x64xf32> to vector<64xf32>
    %c0_20 = arith.constant 0 : index
    %c0_21 = arith.constant 0 : index
    %17 = vector.load %arg11[%c0_20, %c0_21] : memref<64x32xbf16, #tpu.memory_space<vmem>>, vector<64x32xbf16>
    %c0_22 = arith.constant 0 : index
    %c0_23 = arith.constant 0 : index
    %18 = vector.load %arg12[%c0_22, %c0_23] : memref<1x32xf32, #tpu.memory_space<vmem>>, vector<1x32xf32>
    %19 = vector.shape_cast %18 : vector<1x32xf32> to vector<32xf32>
    %cst = arith.constant dense<0.000000e+00> : vector<16xf32>
    %20 = vector.multi_reduction <add>, %1, %cst [1] : vector<16x32xf32> to vector<16xf32>
    %21 = vector.shape_cast %20 : vector<16xf32> to vector<16x1xf32>
    %cst_24 = arith.constant 3.200000e+01 : f32
    %22 = vector.broadcast %cst_24 : f32 to vector<16x1xf32>
    %23 = arith.divf %21, %22 : vector<16x1xf32>
    %24 = vector.broadcast %23 : vector<16x1xf32> to vector<16x32xf32>
    %25 = arith.subf %1, %24 : vector<16x32xf32>
    %26 = arith.mulf %25, %25 : vector<16x32xf32>
    %cst_25 = arith.constant dense<0.000000e+00> : vector<16xf32>
    %27 = vector.multi_reduction <add>, %26, %cst_25 [1] : vector<16x32xf32> to vector<16xf32>
    %28 = vector.shape_cast %27 : vector<16xf32> to vector<16x1xf32>
    %cst_26 = arith.constant 3.200000e+01 : f32
    %29 = vector.broadcast %cst_26 : f32 to vector<16x1xf32>
    %30 = arith.divf %28, %29 : vector<16x1xf32>
    %31 = vector.broadcast %23 : vector<16x1xf32> to vector<16x32xf32>
    %32 = arith.subf %1, %31 : vector<16x32xf32>
    %cst_27 = arith.constant 9.99999974E-6 : f32
    %33 = vector.broadcast %cst_27 : f32 to vector<16x1xf32>
    %34 = arith.addf %30, %33 : vector<16x1xf32>
    %35 = math.rsqrt %34 : vector<16x1xf32>
    %36 = vector.broadcast %35 : vector<16x1xf32> to vector<16x32xf32>
    %37 = arith.mulf %32, %36 : vector<16x32xf32>
    %38 = vector.shape_cast %3 : vector<32xf32> to vector<1x32xf32>
    %39 = vector.broadcast %38 : vector<1x32xf32> to vector<16x32xf32>
    %40 = arith.mulf %37, %39 : vector<16x32xf32>
    %41 = vector.shape_cast %5 : vector<32xf32> to vector<1x32xf32>
    %42 = vector.broadcast %41 : vector<1x32xf32> to vector<16x32xf32>
    %43 = arith.addf %40, %42 : vector<16x32xf32>
    %44 = arith.truncf %43 : vector<16x32xf32> to vector<16x32xbf16>
    %cst_28 = arith.constant dense<0.000000e+00> : vector<16x96xf32>
    %45 = tpu.matmul %44, %10, %cst_28 {dimension_numbers = #tpu.dot_dimension_numbers<[1], [0], [0], [1], [0, 0, 1, 1], [], []>} : vector<16x32xbf16>, vector<32x96xbf16>, vector<16x96xf32> -> vector<16x96xf32>
    %46 = vector.extract_strided_slice %45 {offsets = [0, 0], sizes = [16, 32], strides = [1, 1]} : vector<16x96xf32> to vector<16x32xf32>
    %47 = vector.extract_strided_slice %45 {offsets = [0, 32], sizes = [16, 32], strides = [1, 1]} : vector<16x96xf32> to vector<16x32xf32>
    %48 = vector.extract_strided_slice %45 {offsets = [0, 64], sizes = [16, 32], strides = [1, 1]} : vector<16x96xf32> to vector<16x32xf32>
    %cst_29 = arith.constant 0.000000e+00 : f32
    %49 = vector.broadcast %cst_29 : f32 to vector<16x32xf32>
    %50 = vector.extract_strided_slice %46 {offsets = [0, 0], sizes = [16, 8], strides = [1, 1]} : vector<16x32xf32> to vector<16x8xf32>
    %51 = vector.shape_cast %50 : vector<16x8xf32> to vector<2x8x8xf32>
    %52 = arith.truncf %51 : vector<2x8x8xf32> to vector<2x8x8xbf16>
    %53 = vector.extract_strided_slice %47 {offsets = [0, 0], sizes = [16, 8], strides = [1, 1]} : vector<16x32xf32> to vector<16x8xf32>
    %54 = vector.shape_cast %53 : vector<16x8xf32> to vector<2x8x8xf32>
    %55 = arith.truncf %54 : vector<2x8x8xf32> to vector<2x8x8xbf16>
    %56 = vector.extract_strided_slice %48 {offsets = [0, 0], sizes = [16, 8], strides = [1, 1]} : vector<16x32xf32> to vector<16x8xf32>
    %57 = vector.shape_cast %56 : vector<16x8xf32> to vector<2x8x8xf32>
    %58 = arith.truncf %57 : vector<2x8x8xf32> to vector<2x8x8xbf16>
    "tpu.trace_start"() <{level = 10 : i32, message = "bnd,bmd->bnm"}> : () -> ()
    %cst_30 = arith.constant dense<0.000000e+00> : vector<2x8x8xf32>
    %59 = tpu.matmul %52, %55, %cst_30 {dimension_numbers = #tpu.dot_dimension_numbers<[2], [2], [1], [1], [0, 0, 0, 1, 1, 1], [0], [0]>} : vector<2x8x8xbf16>, vector<2x8x8xbf16>, vector<2x8x8xf32> -> vector<2x8x8xf32>
    "tpu.trace_stop"() : () -> ()
    %cst_31 = arith.constant 0.353553385 : f32
    %60 = vector.broadcast %cst_31 : f32 to vector<2x8x8xf32>
    %61 = arith.mulf %59, %60 : vector<2x8x8xf32>
    %cst_32 = arith.constant dense<0xFF800000> : vector<2x8xf32>
    %62 = vector.multi_reduction <maximumf>, %61, %cst_32 [2] : vector<2x8x8xf32> to vector<2x8xf32>
    %63 = vector.shape_cast %62 : vector<2x8xf32> to vector<2x8x1xf32>
    %64 = vector.broadcast %63 : vector<2x8x1xf32> to vector<2x8x8xf32>
    %65 = arith.subf %61, %64 : vector<2x8x8xf32>
    %66 = math.exp %65 : vector<2x8x8xf32>
    %cst_33 = arith.constant dense<0.000000e+00> : vector<2x8xf32>
    %67 = vector.multi_reduction <add>, %66, %cst_33 [2] : vector<2x8x8xf32> to vector<2x8xf32>
    %68 = vector.shape_cast %67 : vector<2x8xf32> to vector<2x8x1xf32>
    %69 = tpu.reciprocal %68 {approx = true} : vector<2x8x1xf32> -> vector<2x8x1xf32>
    %70 = vector.broadcast %69 : vector<2x8x1xf32> to vector<2x8x8xf32>
    %71 = arith.mulf %66, %70 : vector<2x8x8xf32>
    %72 = arith.truncf %71 : vector<2x8x8xf32> to vector<2x8x8xbf16>
    "tpu.trace_start"() <{level = 10 : i32, message = "bnm,bmd->bnd"}> : () -> ()
    %cst_34 = arith.constant dense<0.000000e+00> : vector<2x8x8xf32>
    %73 = tpu.matmul %72, %58, %cst_34 {dimension_numbers = #tpu.dot_dimension_numbers<[2], [1], [1], [2], [0, 0, 0, 1, 1, 2], [0], [0]>} : vector<2x8x8xbf16>, vector<2x8x8xbf16>, vector<2x8x8xf32> -> vector<2x8x8xf32>
    "tpu.trace_stop"() : () -> ()
    %74 = vector.shape_cast %73 : vector<2x8x8xf32> to vector<16x8xf32>
    %75 = arith.truncf %74 : vector<16x8xf32> to vector<16x8xbf16>
    %76 = vector.extract_strided_slice %11 {offsets = [0, 0], sizes = [8, 32], strides = [1, 1]} : vector<32x32xbf16> to vector<8x32xbf16>
    %cst_35 = arith.constant dense<0.000000e+00> : vector<16x32xf32>
    %77 = tpu.matmul %75, %76, %cst_35 {dimension_numbers = #tpu.dot_dimension_numbers<[1], [0], [0], [1], [0, 0, 1, 1], [], []>} : vector<16x8xbf16>, vector<8x32xbf16>, vector<16x32xf32> -> vector<16x32xf32>
    %78 = arith.addf %49, %77 : vector<16x32xf32>
    %79 = vector.extract_strided_slice %46 {offsets = [0, 8], sizes = [16, 8], strides = [1, 1]} : vector<16x32xf32> to vector<16x8xf32>
    %80 = vector.shape_cast %79 : vector<16x8xf32> to vector<2x8x8xf32>
    %81 = arith.truncf %80 : vector<2x8x8xf32> to vector<2x8x8xbf16>
    %82 = vector.extract_strided_slice %47 {offsets = [0, 8], sizes = [16, 8], strides = [1, 1]} : vector<16x32xf32> to vector<16x8xf32>
    %83 = vector.shape_cast %82 : vector<16x8xf32> to vector<2x8x8xf32>
    %84 = arith.truncf %83 : vector<2x8x8xf32> to vector<2x8x8xbf16>
    %85 = vector.extract_strided_slice %48 {offsets = [0, 8], sizes = [16, 8], strides = [1, 1]} : vector<16x32xf32> to vector<16x8xf32>
    %86 = vector.shape_cast %85 : vector<16x8xf32> to vector<2x8x8xf32>
    %87 = arith.truncf %86 : vector<2x8x8xf32> to vector<2x8x8xbf16>
    "tpu.trace_start"() <{level = 10 : i32, message = "bnd,bmd->bnm"}> : () -> ()
    %cst_36 = arith.constant dense<0.000000e+00> : vector<2x8x8xf32>
    %88 = tpu.matmul %81, %84, %cst_36 {dimension_numbers = #tpu.dot_dimension_numbers<[2], [2], [1], [1], [0, 0, 0, 1, 1, 1], [0], [0]>} : vector<2x8x8xbf16>, vector<2x8x8xbf16>, vector<2x8x8xf32> -> vector<2x8x8xf32>
    "tpu.trace_stop"() : () -> ()
    %cst_37 = arith.constant 0.353553385 : f32
    %89 = vector.broadcast %cst_37 : f32 to vector<2x8x8xf32>
    %90 = arith.mulf %88, %89 : vector<2x8x8xf32>
    %cst_38 = arith.constant dense<0xFF800000> : vector<2x8xf32>
    %91 = vector.multi_reduction <maximumf>, %90, %cst_38 [2] : vector<2x8x8xf32> to vector<2x8xf32>
    %92 = vector.shape_cast %91 : vector<2x8xf32> to vector<2x8x1xf32>
    %93 = vector.broadcast %92 : vector<2x8x1xf32> to vector<2x8x8xf32>
    %94 = arith.subf %90, %93 : vector<2x8x8xf32>
    %95 = math.exp %94 : vector<2x8x8xf32>
    %cst_39 = arith.constant dense<0.000000e+00> : vector<2x8xf32>
    %96 = vector.multi_reduction <add>, %95, %cst_39 [2] : vector<2x8x8xf32> to vector<2x8xf32>
    %97 = vector.shape_cast %96 : vector<2x8xf32> to vector<2x8x1xf32>
    %98 = tpu.reciprocal %97 {approx = true} : vector<2x8x1xf32> -> vector<2x8x1xf32>
    %99 = vector.broadcast %98 : vector<2x8x1xf32> to vector<2x8x8xf32>
    %100 = arith.mulf %95, %99 : vector<2x8x8xf32>
    %101 = arith.truncf %100 : vector<2x8x8xf32> to vector<2x8x8xbf16>
    "tpu.trace_start"() <{level = 10 : i32, message = "bnm,bmd->bnd"}> : () -> ()
    %cst_40 = arith.constant dense<0.000000e+00> : vector<2x8x8xf32>
    %102 = tpu.matmul %101, %87, %cst_40 {dimension_numbers = #tpu.dot_dimension_numbers<[2], [1], [1], [2], [0, 0, 0, 1, 1, 2], [0], [0]>} : vector<2x8x8xbf16>, vector<2x8x8xbf16>, vector<2x8x8xf32> -> vector<2x8x8xf32>
    "tpu.trace_stop"() : () -> ()
    %103 = vector.shape_cast %102 : vector<2x8x8xf32> to vector<16x8xf32>
    %104 = arith.truncf %103 : vector<16x8xf32> to vector<16x8xbf16>
    %105 = vector.extract_strided_slice %11 {offsets = [8, 0], sizes = [8, 32], strides = [1, 1]} : vector<32x32xbf16> to vector<8x32xbf16>
    %cst_41 = arith.constant dense<0.000000e+00> : vector<16x32xf32>
    %106 = tpu.matmul %104, %105, %cst_41 {dimension_numbers = #tpu.dot_dimension_numbers<[1], [0], [0], [1], [0, 0, 1, 1], [], []>} : vector<16x8xbf16>, vector<8x32xbf16>, vector<16x32xf32> -> vector<16x32xf32>
    %107 = arith.addf %78, %106 : vector<16x32xf32>
    %108 = vector.extract_strided_slice %46 {offsets = [0, 16], sizes = [16, 8], strides = [1, 1]} : vector<16x32xf32> to vector<16x8xf32>
    %109 = vector.shape_cast %108 : vector<16x8xf32> to vector<2x8x8xf32>
    %110 = arith.truncf %109 : vector<2x8x8xf32> to vector<2x8x8xbf16>
    %111 = vector.extract_strided_slice %47 {offsets = [0, 16], sizes = [16, 8], strides = [1, 1]} : vector<16x32xf32> to vector<16x8xf32>
    %112 = vector.shape_cast %111 : vector<16x8xf32> to vector<2x8x8xf32>
    %113 = arith.truncf %112 : vector<2x8x8xf32> to vector<2x8x8xbf16>
    %114 = vector.extract_strided_slice %48 {offsets = [0, 16], sizes = [16, 8], strides = [1, 1]} : vector<16x32xf32> to vector<16x8xf32>
    %115 = vector.shape_cast %114 : vector<16x8xf32> to vector<2x8x8xf32>
    %116 = arith.truncf %115 : vector<2x8x8xf32> to vector<2x8x8xbf16>
    "tpu.trace_start"() <{level = 10 : i32, message = "bnd,bmd->bnm"}> : () -> ()
    %cst_42 = arith.constant dense<0.000000e+00> : vector<2x8x8xf32>
    %117 = tpu.matmul %110, %113, %cst_42 {dimension_numbers = #tpu.dot_dimension_numbers<[2], [2], [1], [1], [0, 0, 0, 1, 1, 1], [0], [0]>} : vector<2x8x8xbf16>, vector<2x8x8xbf16>, vector<2x8x8xf32> -> vector<2x8x8xf32>
    "tpu.trace_stop"() : () -> ()
    %cst_43 = arith.constant 0.353553385 : f32
    %118 = vector.broadcast %cst_43 : f32 to vector<2x8x8xf32>
    %119 = arith.mulf %117, %118 : vector<2x8x8xf32>
    %cst_44 = arith.constant dense<0xFF800000> : vector<2x8xf32>
    %120 = vector.multi_reduction <maximumf>, %119, %cst_44 [2] : vector<2x8x8xf32> to vector<2x8xf32>
    %121 = vector.shape_cast %120 : vector<2x8xf32> to vector<2x8x1xf32>
    %122 = vector.broadcast %121 : vector<2x8x1xf32> to vector<2x8x8xf32>
    %123 = arith.subf %119, %122 : vector<2x8x8xf32>
    %124 = math.exp %123 : vector<2x8x8xf32>
    %cst_45 = arith.constant dense<0.000000e+00> : vector<2x8xf32>
    %125 = vector.multi_reduction <add>, %124, %cst_45 [2] : vector<2x8x8xf32> to vector<2x8xf32>
    %126 = vector.shape_cast %125 : vector<2x8xf32> to vector<2x8x1xf32>
    %127 = tpu.reciprocal %126 {approx = true} : vector<2x8x1xf32> -> vector<2x8x1xf32>
    %128 = vector.broadcast %127 : vector<2x8x1xf32> to vector<2x8x8xf32>
    %129 = arith.mulf %124, %128 : vector<2x8x8xf32>
    %130 = arith.truncf %129 : vector<2x8x8xf32> to vector<2x8x8xbf16>
    "tpu.trace_start"() <{level = 10 : i32, message = "bnm,bmd->bnd"}> : () -> ()
    %cst_46 = arith.constant dense<0.000000e+00> : vector<2x8x8xf32>
    %131 = tpu.matmul %130, %116, %cst_46 {dimension_numbers = #tpu.dot_dimension_numbers<[2], [1], [1], [2], [0, 0, 0, 1, 1, 2], [0], [0]>} : vector<2x8x8xbf16>, vector<2x8x8xbf16>, vector<2x8x8xf32> -> vector<2x8x8xf32>
    "tpu.trace_stop"() : () -> ()
    %132 = vector.shape_cast %131 : vector<2x8x8xf32> to vector<16x8xf32>
    %133 = arith.truncf %132 : vector<16x8xf32> to vector<16x8xbf16>
    %134 = vector.extract_strided_slice %11 {offsets = [16, 0], sizes = [8, 32], strides = [1, 1]} : vector<32x32xbf16> to vector<8x32xbf16>
    %cst_47 = arith.constant dense<0.000000e+00> : vector<16x32xf32>
    %135 = tpu.matmul %133, %134, %cst_47 {dimension_numbers = #tpu.dot_dimension_numbers<[1], [0], [0], [1], [0, 0, 1, 1], [], []>} : vector<16x8xbf16>, vector<8x32xbf16>, vector<16x32xf32> -> vector<16x32xf32>
    %136 = arith.addf %107, %135 : vector<16x32xf32>
    %137 = vector.extract_strided_slice %46 {offsets = [0, 24], sizes = [16, 8], strides = [1, 1]} : vector<16x32xf32> to vector<16x8xf32>
    %138 = vector.shape_cast %137 : vector<16x8xf32> to vector<2x8x8xf32>
    %139 = arith.truncf %138 : vector<2x8x8xf32> to vector<2x8x8xbf16>
    %140 = vector.extract_strided_slice %47 {offsets = [0, 24], sizes = [16, 8], strides = [1, 1]} : vector<16x32xf32> to vector<16x8xf32>
    %141 = vector.shape_cast %140 : vector<16x8xf32> to vector<2x8x8xf32>
    %142 = arith.truncf %141 : vector<2x8x8xf32> to vector<2x8x8xbf16>
    %143 = vector.extract_strided_slice %48 {offsets = [0, 24], sizes = [16, 8], strides = [1, 1]} : vector<16x32xf32> to vector<16x8xf32>
    %144 = vector.shape_cast %143 : vector<16x8xf32> to vector<2x8x8xf32>
    %145 = arith.truncf %144 : vector<2x8x8xf32> to vector<2x8x8xbf16>
    "tpu.trace_start"() <{level = 10 : i32, message = "bnd,bmd->bnm"}> : () -> ()
    %cst_48 = arith.constant dense<0.000000e+00> : vector<2x8x8xf32>
    %146 = tpu.matmul %139, %142, %cst_48 {dimension_numbers = #tpu.dot_dimension_numbers<[2], [2], [1], [1], [0, 0, 0, 1, 1, 1], [0], [0]>} : vector<2x8x8xbf16>, vector<2x8x8xbf16>, vector<2x8x8xf32> -> vector<2x8x8xf32>
    "tpu.trace_stop"() : () -> ()
    %cst_49 = arith.constant 0.353553385 : f32
    %147 = vector.broadcast %cst_49 : f32 to vector<2x8x8xf32>
    %148 = arith.mulf %146, %147 : vector<2x8x8xf32>
    %cst_50 = arith.constant dense<0xFF800000> : vector<2x8xf32>
    %149 = vector.multi_reduction <maximumf>, %148, %cst_50 [2] : vector<2x8x8xf32> to vector<2x8xf32>
    %150 = vector.shape_cast %149 : vector<2x8xf32> to vector<2x8x1xf32>
    %151 = vector.broadcast %150 : vector<2x8x1xf32> to vector<2x8x8xf32>
    %152 = arith.subf %148, %151 : vector<2x8x8xf32>
    %153 = math.exp %152 : vector<2x8x8xf32>
    %cst_51 = arith.constant dense<0.000000e+00> : vector<2x8xf32>
    %154 = vector.multi_reduction <add>, %153, %cst_51 [2] : vector<2x8x8xf32> to vector<2x8xf32>
    %155 = vector.shape_cast %154 : vector<2x8xf32> to vector<2x8x1xf32>
    %156 = tpu.reciprocal %155 {approx = true} : vector<2x8x1xf32> -> vector<2x8x1xf32>
    %157 = vector.broadcast %156 : vector<2x8x1xf32> to vector<2x8x8xf32>
    %158 = arith.mulf %153, %157 : vector<2x8x8xf32>
    %159 = arith.truncf %158 : vector<2x8x8xf32> to vector<2x8x8xbf16>
    "tpu.trace_start"() <{level = 10 : i32, message = "bnm,bmd->bnd"}> : () -> ()
    %cst_52 = arith.constant dense<0.000000e+00> : vector<2x8x8xf32>
    %160 = tpu.matmul %159, %145, %cst_52 {dimension_numbers = #tpu.dot_dimension_numbers<[2], [1], [1], [2], [0, 0, 0, 1, 1, 2], [0], [0]>} : vector<2x8x8xbf16>, vector<2x8x8xbf16>, vector<2x8x8xf32> -> vector<2x8x8xf32>
    "tpu.trace_stop"() : () -> ()
    %161 = vector.shape_cast %160 : vector<2x8x8xf32> to vector<16x8xf32>
    %162 = arith.truncf %161 : vector<16x8xf32> to vector<16x8xbf16>
    %163 = vector.extract_strided_slice %11 {offsets = [24, 0], sizes = [8, 32], strides = [1, 1]} : vector<32x32xbf16> to vector<8x32xbf16>
    %cst_53 = arith.constant dense<0.000000e+00> : vector<16x32xf32>
    %164 = tpu.matmul %162, %163, %cst_53 {dimension_numbers = #tpu.dot_dimension_numbers<[1], [0], [0], [1], [0, 0, 1, 1], [], []>} : vector<16x8xbf16>, vector<8x32xbf16>, vector<16x32xf32> -> vector<16x32xf32>
    %165 = arith.addf %136, %164 : vector<16x32xf32>
    %166 = vector.shape_cast %13 : vector<32xf32> to vector<1x32xf32>
    %167 = vector.broadcast %166 : vector<1x32xf32> to vector<16x32xf32>
    %168 = arith.addf %165, %167 : vector<16x32xf32>
    %169 = arith.addf %1, %168 : vector<16x32xf32>
    %cst_54 = arith.constant dense<0.000000e+00> : vector<16xf32>
    %170 = vector.multi_reduction <add>, %169, %cst_54 [1] : vector<16x32xf32> to vector<16xf32>
    %171 = vector.shape_cast %170 : vector<16xf32> to vector<16x1xf32>
    %cst_55 = arith.constant 3.200000e+01 : f32
    %172 = vector.broadcast %cst_55 : f32 to vector<16x1xf32>
    %173 = arith.divf %171, %172 : vector<16x1xf32>
    %174 = vector.broadcast %173 : vector<16x1xf32> to vector<16x32xf32>
    %175 = arith.subf %169, %174 : vector<16x32xf32>
    %176 = arith.mulf %175, %175 : vector<16x32xf32>
    %cst_56 = arith.constant dense<0.000000e+00> : vector<16xf32>
    %177 = vector.multi_reduction <add>, %176, %cst_56 [1] : vector<16x32xf32> to vector<16xf32>
    %178 = vector.shape_cast %177 : vector<16xf32> to vector<16x1xf32>
    %cst_57 = arith.constant 3.200000e+01 : f32
    %179 = vector.broadcast %cst_57 : f32 to vector<16x1xf32>
    %180 = arith.divf %178, %179 : vector<16x1xf32>
    %181 = vector.broadcast %173 : vector<16x1xf32> to vector<16x32xf32>
    %182 = arith.subf %169, %181 : vector<16x32xf32>
    %cst_58 = arith.constant 9.99999974E-6 : f32
    %183 = vector.broadcast %cst_58 : f32 to vector<16x1xf32>
    %184 = arith.addf %180, %183 : vector<16x1xf32>
    %185 = math.rsqrt %184 : vector<16x1xf32>
    %186 = vector.broadcast %185 : vector<16x1xf32> to vector<16x32xf32>
    %187 = arith.mulf %182, %186 : vector<16x32xf32>
    %188 = vector.shape_cast %7 : vector<32xf32> to vector<1x32xf32>
    %189 = vector.broadcast %188 : vector<1x32xf32> to vector<16x32xf32>
    %190 = arith.mulf %187, %189 : vector<16x32xf32>
    %191 = vector.shape_cast %9 : vector<32xf32> to vector<1x32xf32>
    %192 = vector.broadcast %191 : vector<1x32xf32> to vector<16x32xf32>
    %193 = arith.addf %190, %192 : vector<16x32xf32>
    %194 = arith.truncf %193 : vector<16x32xf32> to vector<16x32xbf16>
    %cst_59 = arith.constant dense<0.000000e+00> : vector<16x64xf32>
    %195 = tpu.matmul %194, %14, %cst_59 {dimension_numbers = #tpu.dot_dimension_numbers<[1], [0], [0], [1], [0, 0, 1, 1], [], []>} : vector<16x32xbf16>, vector<32x64xbf16>, vector<16x64xf32> -> vector<16x64xf32>
    %196 = vector.shape_cast %16 : vector<64xf32> to vector<1x64xf32>
    %197 = vector.broadcast %196 : vector<1x64xf32> to vector<16x64xf32>
    %198 = arith.addf %195, %197 : vector<16x64xf32>
    %cst_60 = arith.constant 5.000000e-01 : f32
    %199 = vector.broadcast %cst_60 : f32 to vector<16x64xf32>
    %200 = arith.mulf %199, %198 : vector<16x64xf32>
    %cst_61 = arith.constant 2.000000e+00 : f32
    %201 = math.sqrt %cst_61 : f32
    %202 = vector.broadcast %201 : f32 to vector<16x64xf32>
    %203 = arith.divf %198, %202 : vector<16x64xf32>
    %204 = math.erf %203 : vector<16x64xf32>
    %cst_62 = arith.constant 1.000000e+00 : f32
    %205 = vector.broadcast %cst_62 : f32 to vector<16x64xf32>
    %206 = arith.addf %205, %204 : vector<16x64xf32>
    %207 = arith.mulf %200, %206 : vector<16x64xf32>
    %208 = arith.truncf %207 : vector<16x64xf32> to vector<16x64xbf16>
    %cst_63 = arith.constant dense<0.000000e+00> : vector<16x32xf32>
    %209 = tpu.matmul %208, %17, %cst_63 {dimension_numbers = #tpu.dot_dimension_numbers<[1], [0], [0], [1], [0, 0, 1, 1], [], []>} : vector<16x64xbf16>, vector<64x32xbf16>, vector<16x32xf32> -> vector<16x32xf32>
    %210 = vector.shape_cast %19 : vector<32xf32> to vector<1x32xf32>
    %211 = vector.broadcast %210 : vector<1x32xf32> to vector<16x32xf32>
    %212 = arith.addf %209, %211 : vector<16x32xf32>
    %213 = arith.addf %193, %212 : vector<16x32xf32>
    %214 = vector.shape_cast %213 : vector<16x32xf32> to vector<2x8x32xf32>
    %c0_64 = arith.constant 0 : index
    %c0_65 = arith.constant 0 : index
    %c0_66 = arith.constant 0 : index
    %215 = vector.load %arg13[%c0_64, %c0_65, %c0_66] : memref<2x8x32xf32, #tpu.memory_space<vmem>>, vector<2x8x32xf32>
    tpu.vector_store %arg13[%c0_64, %c0_65, %c0_66], %214 {strides = array<i32>} : memref<2x8x32xf32, #tpu.memory_space<vmem>>, vector<2x8x32xf32>,
    return
  }
  func.func @transform_0(%arg0: i32) -> (i32, i32, i32) {
    %c0_i32 = arith.constant 0 : i32
    %c0_i32_0 = arith.constant 0 : i32
    %c0_i32_1 = arith.constant 0 : i32
    return %arg0, %c0_i32, %c0_i32_0 : i32, i32, i32
  }
  func.func @transform_1(%arg0: i32) -> (i32, i32) {
    %c0_i32 = arith.constant 0 : i32
    %c0_i32_0 = arith.constant 0 : i32
    %c0_i32_1 = arith.constant 0 : i32
    return %c0_i32, %c0_i32_0 : i32, i32
  }
  func.func @transform_2(%arg0: i32) -> (i32, i32) {
    %c0_i32 = arith.constant 0 : i32
    %c0_i32_0 = arith.constant 0 : i32
    %c0_i32_1 = arith.constant 0 : i32
    return %c0_i32, %c0_i32_0 : i32, i32
  }
  func.func @transform_3(%arg0: i32) -> (i32, i32) {
    %c0_i32 = arith.constant 0 : i32
    %c0_i32_0 = arith.constant 0 : i32
    %c0_i32_1 = arith.constant 0 : i32
    return %c0_i32, %c0_i32_0 : i32, i32
  }
  func.func @transform_4(%arg0: i32) -> (i32, i32) {
    %c0_i32 = arith.constant 0 : i32
    %c0_i32_0 = arith.constant 0 : i32
    %c0_i32_1 = arith.constant 0 : i32
    return %c0_i32, %c0_i32_0 : i32, i32
  }
  func.func @transform_5(%arg0: i32) -> (i32, i32) {
    %c0_i32 = arith.constant 0 : i32
    %c0_i32_0 = arith.constant 0 : i32
    %c0_i32_1 = arith.constant 0 : i32
    return %c0_i32, %c0_i32_0 : i32, i32
  }
  func.func @transform_6(%arg0: i32) -> (i32, i32) {
    %c0_i32 = arith.constant 0 : i32
    %c0_i32_0 = arith.constant 0 : i32
    %c0_i32_1 = arith.constant 0 : i32
    return %c0_i32, %c0_i32_0 : i32, i32
  }
  func.func @transform_7(%arg0: i32) -> (i32, i32) {
    %c0_i32 = arith.constant 0 : i32
    %c0_i32_0 = arith.constant 0 : i32
    %c0_i32_1 = arith.constant 0 : i32
    return %c0_i32, %c0_i32_0 : i32, i32
  }
  func.func @transform_8(%arg0: i32) -> (i32, i32) {
    %c0_i32 = arith.constant 0 : i32
    %c0_i32_0 = arith.constant 0 : i32
    %c0_i32_1 = arith.constant 0 : i32
    return %c0_i32, %c0_i32_0 : i32, i32
  }
  func.func @transform_9(%arg0: i32) -> (i32, i32) {
    %c0_i32 = arith.constant 0 : i32
    %c0_i32_0 = arith.constant 0 : i32
    %c0_i32_1 = arith.constant 0 : i32
    return %c0_i32, %c0_i32_0 : i32, i32
  }
  func.func @transform_10(%arg0: i32) -> (i32, i32) {
    %c0_i32 = arith.constant 0 : i32
    %c0_i32_0 = arith.constant 0 : i32
    %c0_i32_1 = arith.constant 0 : i32
    return %c0_i32, %c0_i32_0 : i32, i32
  }
  func.func @transform_11(%arg0: i32) -> (i32, i32) {
    %c0_i32 = arith.constant 0 : i32
    %c0_i32_0 = arith.constant 0 : i32
    %c0_i32_1 = arith.constant 0 : i32
    return %c0_i32, %c0_i32_0 : i32, i32
  }
  func.func @transform_12(%arg0: i32) -> (i32, i32, i32) {
    %c0_i32 = arith.constant 0 : i32
    %c0_i32_0 = arith.constant 0 : i32
    %c0_i32_1 = arith.constant 0 : i32
    return %arg0, %c0_i32, %c0_i32_0 : i32, i32, i32
  }
}

</mosaic_0001>

<llo_original>
// kernel: tpu_custom_call.1
$region0: #{tpu_custom_call.1}
  #allocation0 [shape = 'u32[]', space=smem, size = 0x4, offset = 0x4, fixed_abs, tag = 'smem constant byte address 0x4 - core index']
  #allocation1 [shape = 'u32[144,128]{1,0:T(1,128)}', space=vmem, size = 0x12000, scoped, tag = 'internal scratch']
  %s0 = inlined_call_operand.vmem [shape: f32[2,8,32], index: 0, kind: input, shape index: {}]
  %s1 = inlined_call_operand.vmem [shape: f32[1,32], index: 1, kind: input, shape index: {}]
  %s2 = inlined_call_operand.vmem [shape: f32[1,32], index: 2, kind: input, shape index: {}]
  %s3 = inlined_call_operand.vmem [shape: bf16[32,96], index: 3, kind: input, shape index: {}]
  %s4 = inlined_call_operand.vmem [shape: bf16[32,32], index: 4, kind: input, shape index: {}]
  %s5 = inlined_call_operand.hbm [shape: f32[1,32], index: 5, kind: input, shape index: {}]
  %s6 = inlined_call_operand.hbm [shape: f32[1,32], index: 6, kind: input, shape index: {}]
  %s7 = inlined_call_operand.hbm [shape: f32[1,32], index: 7, kind: input, shape index: {}]
  %s8 = inlined_call_operand.hbm [shape: bf16[32,64], index: 8, kind: input, shape index: {}]
  %s9 = inlined_call_operand.hbm [shape: f32[1,64], index: 9, kind: input, shape index: {}]
  %s10 = inlined_call_operand.vmem [shape: bf16[64,32], index: 10, kind: input, shape index: {}]
  %s11 = inlined_call_operand.vmem [shape: f32[1,32], index: 11, kind: input, shape index: {}]
  %s12 = inlined_call_operand.hbm [shape: f32[2,8,32], index: 12, kind: output, shape index: {}]
  %s13 = sld [smem:[#allocation0]]
  $region78: #{tpu_custom_call.1} parent=0
    _
  %s15 = ssub.s32 1, %s13
  %s16 = scalar_select 0, %s15, %s13
  $region1: #{tpu_custom_call.1} parent=0
    #allocation2 [shape = 'u8[512]{0}', space=vmem, size = 0x400, scoped, tag = 'input window, operand 5, single buffered']
    #allocation3 [shape = 's32[1]{0}', space=sflag, size = 0x4, scoped, tag = 'scoped memory for tpu_custom_call.1']
    #allocation4 [shape = 's32[1]{0}', space=sflag, size = 0x4, scoped, tag = 'scoped memory for tpu_custom_call.1']
    #allocation5 [shape = 'u8[512]{0}', space=vmem, size = 0x400, scoped, tag = 'input window, operand 6, single buffered']
    #allocation6 [shape = 's32[1]{0}', space=sflag, size = 0x4, scoped, tag = 'scoped memory for tpu_custom_call.1']
    #allocation7 [shape = 'u8[512]{0}', space=vmem, size = 0x400, scoped, tag = 'input window, operand 7, single buffered']
    #allocation8 [shape = 'u8[8192]{0}', space=vmem, size = 0x2000, scoped, tag = 'input window, operand 8, single buffered']
    #allocation9 [shape = 's32[1]{0}', space=sflag, size = 0x4, scoped, tag = 'scoped memory for tpu_custom_call.1']
    #allocation10 [shape = 'u8[512]{0}', space=vmem, size = 0x400, scoped, tag = 'input window, operand 9, single buffered']
    #allocation11 [shape = 'u8[8192]{0}', space=vmem, size = 0x2000, scoped, tag = 'output window, operand 0, single buffered']
    %17 = vsyncpa [#allocation3], 0
    %18 = vsyncpa [#allocation6], 0
    %19 = vsyncpa [#allocation9], 0
    %20 = vsyncpa [#allocation4], 0
    // Predicated region
    $region2: #{tpu_custom_call.1} parent=1 // pred_check
      _
    $region3: #{tpu_custom_call.1} parent=1 // pred_check_branch
      %22 = sbr.rel (0) target = $region5
    $region4: #{tpu_custom_call.1} parent=1 // pred_region
      _
    $region5: #{tpu_custom_call.1} parent=1 // pred_fallthru
      _
    // Predicated region
    $region6: #{tpu_custom_call.1} parent=1 // pred_check
      _
    $region7: #{tpu_custom_call.1} parent=1 // pred_check_branch
      %24 = sbr.rel (0) target = $region9
    $region8: #{tpu_custom_call.1} parent=1 // pred_region
      _
    $region9: #{tpu_custom_call.1} parent=1 // pred_fallthru
      _
    // Predicated region
    $region10: #{tpu_custom_call.1} parent=1 // pred_check
      _
    $region11: #{tpu_custom_call.1} parent=1 // pred_check_branch
      %26 = sbr.rel (0) target = $region13
    $region12: #{tpu_custom_call.1} parent=1 // pred_region
      _
    $region13: #{tpu_custom_call.1} parent=1 // pred_fallthru
      _
    // Predicated region
    $region14: #{tpu_custom_call.1} parent=1 // pred_check
      _
    $region15: #{tpu_custom_call.1} parent=1 // pred_check_branch
      %28 = sbr.rel (0) target = $region17
    $region16: #{tpu_custom_call.1} parent=1 // pred_region
      _
    $region17: #{tpu_custom_call.1} parent=1 // pred_fallthru
      _
    // Predicated region
    $region18: #{tpu_custom_call.1} parent=1 // pred_check
      _
    $region19: #{tpu_custom_call.1} parent=1 // pred_check_branch
      %30 = sbr.rel (0) target = $region21
    $region20: #{tpu_custom_call.1} parent=1 // pred_region
      _
    $region21: #{tpu_custom_call.1} parent=1 // pred_fallthru
      _
    // Predicated region
    $region22: #{tpu_custom_call.1} parent=1 // pred_check
      _
    $region23: #{tpu_custom_call.1} parent=1 // pred_check_branch
      %32 = sbr.rel (0) target = $region25
    $region24: #{tpu_custom_call.1} parent=1 // pred_region
      %s34 = ssub.s32 16, 16
      %35 = vsyncadd [#allocation3], %s34
      %s37 = sshll.u32 [#allocation2], 4
      %s38 = int_to_ptr.vmem [resolvable:$true] %s37
      %40 = dma.hbm_to_vmem [thread:$0]  %s5, 16, %s38, [#allocation3]
    $region25: #{tpu_custom_call.1} parent=1 // pred_fallthru
      _
    // Predicated region
    $region26: #{tpu_custom_call.1} parent=1 // pred_check
      _
    $region27: #{tpu_custom_call.1} parent=1 // pred_check_branch
      %42 = sbr.rel (0) target = $region29
    $region28: #{tpu_custom_call.1} parent=1 // pred_region
      %s44 = ssub.s32 16, 16
      %45 = vsyncadd [#allocation6], %s44
      %s47 = sshll.u32 [#allocation5], 4
      %s48 = int_to_ptr.vmem [resolvable:$true] %s47
      %50 = dma.hbm_to_vmem [thread:$0]  %s6, 16, %s48, [#allocation6]
    $region29: #{tpu_custom_call.1} parent=1 // pred_fallthru
      _
    // Predicated region
    $region30: #{tpu_custom_call.1} parent=1 // pred_check
      _
    $region31: #{tpu_custom_call.1} parent=1 // pred_check_branch
      %52 = sbr.rel (0) target = $region33
    $region32: #{tpu_custom_call.1} parent=1 // pred_region
      %s54 = ssub.s32 16, 16
      %55 = vsyncadd [#allocation6], %s54
      %s57 = sshll.u32 [#allocation7], 4
      %s58 = int_to_ptr.vmem [resolvable:$true] %s57
      %60 = dma.hbm_to_vmem [thread:$0]  %s7, 16, %s58, [#allocation6]
    $region33: #{tpu_custom_call.1} parent=1 // pred_fallthru
      _
    // Predicated region
    $region34: #{tpu_custom_call.1} parent=1 // pred_check
      _
    $region35: #{tpu_custom_call.1} parent=1 // pred_check_branch
      %62 = sbr.rel (0) target = $region37
    $region36: #{tpu_custom_call.1} parent=1 // pred_region
      %s64 = ssub.s32 256, 256
      %65 = vsyncadd [#allocation9], %s64
      %s66 = sshll.u32 [#allocation8], 4
      %s67 = int_to_ptr.vmem [resolvable:$true] %s66
      %72 = dma.hbm_to_vmem [thread:$0]  %s8, 256, %s67, [#allocation9], 64, 64, 4
    $region37: #{tpu_custom_call.1} parent=1 // pred_fallthru
      _
    // Predicated region
    $region38: #{tpu_custom_call.1} parent=1 // pred_check
      _
    $region39: #{tpu_custom_call.1} parent=1 // pred_check_branch
      %74 = sbr.rel (0) target = $region41
    $region40: #{tpu_custom_call.1} parent=1 // pred_region
      %s76 = ssub.s32 16, 16
      %77 = vsyncadd [#allocation9], %s76
      %s79 = sshll.u32 [#allocation10], 4
      %s80 = int_to_ptr.vmem [resolvable:$true] %s79
      %82 = dma.hbm_to_vmem [thread:$0]  %s9, 16, %s80, [#allocation9]
    $region41: #{tpu_custom_call.1} parent=1 // pred_fallthru
      _
    // Predicated region
    $region42: #{tpu_custom_call.1} parent=1 // pred_check
      _
    $region43: #{tpu_custom_call.1} parent=1 // pred_check_branch
      %84 = sbr.rel (0) target = $region45
    $region44: #{tpu_custom_call.1} parent=1 // pred_region
      _
    $region45: #{tpu_custom_call.1} parent=1 // pred_fallthru
      _
    // Predicated region
    $region46: #{tpu_custom_call.1} parent=1 // pred_check
      _
    $region47: #{tpu_custom_call.1} parent=1 // pred_check_branch
      %86 = sbr.rel (0) target = $region49
    $region48: #{tpu_custom_call.1} parent=1 // pred_region
      _
    $region49: #{tpu_custom_call.1} parent=1 // pred_fallthru
      _
    // Predicated region
    $region50: #{tpu_custom_call.1} parent=1 // pred_check
      _
    $region51: #{tpu_custom_call.1} parent=1 // pred_check_branch
      %88 = sbr.rel (0) target = $region53
    $region52: #{tpu_custom_call.1} parent=1 // pred_region
      %89 = dma.done [#allocation3], 16
    $region53: #{tpu_custom_call.1} parent=1 // pred_fallthru
      _
    // Predicated region
    $region54: #{tpu_custom_call.1} parent=1 // pred_check
      _
    $region55: #{tpu_custom_call.1} parent=1 // pred_check_branch
      %91 = sbr.rel (0) target = $region57
    $region56: #{tpu_custom_call.1} parent=1 // pred_region
      %92 = dma.done [#allocation6], 16
    $region57: #{tpu_custom_call.1} parent=1 // pred_fallthru
      _
    // Predicated region
    $region58: #{tpu_custom_call.1} parent=1 // pred_check
      _
    $region59: #{tpu_custom_call.1} parent=1 // pred_check_branch
      %94 = sbr.rel (0) target = $region61
    $region60: #{tpu_custom_call.1} parent=1 // pred_region
      %95 = dma.done [#allocation6], 16
    $region61: #{tpu_custom_call.1} parent=1 // pred_fallthru
      _
    // Predicated region
    $region62: #{tpu_custom_call.1} parent=1 // pred_check
      _
    $region63: #{tpu_custom_call.1} parent=1 // pred_check_branch
      %97 = sbr.rel (0) target = $region65
    $region64: #{tpu_custom_call.1} parent=1 // pred_region
      %98 = dma.done [#allocation9], 256
    $region65: #{tpu_custom_call.1} parent=1 // pred_fallthru
      _
    // Predicated region
    $region66: #{tpu_custom_call.1} parent=1 // pred_check
      _
    $region67: #{tpu_custom_call.1} parent=1 // pred_check_branch
      %100 = sbr.rel (0) target = $region69
    $region68: #{tpu_custom_call.1} parent=1 // pred_region
      %101 = dma.done [#allocation9], 16
    $region69: #{tpu_custom_call.1} parent=1 // pred_fallthru
      _
    %v103 = vld [vmem:[%s0] sm:$0xff]
    %v104 = vld [vmem:[%s0 + $0x8] sm:$0xff]
    %v105 = vld [vmem:[%s1] sm:$0x1]
    %v106 = vld [vmem:[%s2] sm:$0x1]
    %v107 = vld [vmem:[#allocation5] sm:$0x1]
    %v108 = vld [vmem:[#allocation7] sm:$0x1]
    %v109 = vld [vmem:[%s3] sm:$0xf]
    %v110 = vld [vmem:[%s3 + $0x4] sm:$0xf]
    %v111 = vld [vmem:[%s3 + $0x8] sm:$0xf]
    %v112 = vld [vmem:[%s3 + $0xc] sm:$0xf]
    %v113 = vld [vmem:[%s4] sm:$0xf]
    %v114 = vld [vmem:[%s4 + $0x4] sm:$0xf]
    %v115 = vld [vmem:[%s4 + $0x8] sm:$0xf]
    %v116 = vld [vmem:[%s4 + $0xc] sm:$0xf]
    %v117 = vld [vmem:[#allocation2] sm:$0x1]
    %v118 = vld [vmem:[#allocation8] sm:$0xf]
    %v119 = vld [vmem:[#allocation8 + $0x4] sm:$0xf]
    %v120 = vld [vmem:[#allocation8 + $0x8] sm:$0xf]
    %v121 = vld [vmem:[#allocation8 + $0xc] sm:$0xf]
    %v122 = vld [vmem:[#allocation10] sm:$0x1]
    %v123 = vld [vmem:[%s10] sm:$0xf]
    %v124 = vld [vmem:[%s10 + $0x4] sm:$0xf]
    %v125 = vld [vmem:[%s10 + $0x8] sm:$0xf]
    %v126 = vld [vmem:[%s10 + $0xc] sm:$0xf]
    %v127 = vld [vmem:[%s10 + $0x10] sm:$0xf]
    %v128 = vld [vmem:[%s10 + $0x14] sm:$0xf]
    %v129 = vld [vmem:[%s10 + $0x18] sm:$0xf]
    %v130 = vld [vmem:[%s10 + $0x1c] sm:$0xf]
    %v131 = vld [vmem:[%s11] sm:$0x1]
    %vm132 = vcmask 261120
    %v133 = vsel %vm132, %v103, 0.0
    %134 = vadd.xlane.f32.xlu0 %v133
    %v135 = vpop.xlane.xlu0 %134
    %v136 = vsel %vm132, %v104, 0.0
    %137 = vadd.xlane.f32.xlu0 %v136
    %v138 = vpop.xlane.xlu0 %137
    %v139 = vrcp.pop 32.0
    %v140 = vmul.f32 %v135, %v139
    %v141 = vmul.f32 %v138, %v139
    %v142 = vsub.f32 %v103, %v140
    %v143 = vsub.f32 %v104, %v141
    %v144 = vmul.f32 %v142, %v142
    %v145 = vmul.f32 %v143, %v143
    %v146 = vsel %vm132, %v144, 0.0
    %147 = vadd.xlane.f32.xlu0 %v146
    %v148 = vpop.xlane.xlu0 %147
    %v149 = vsel %vm132, %v145, 0.0
    %150 = vadd.xlane.f32.xlu0 %v149
    %v151 = vpop.xlane.xlu0 %150
    %v152 = vmul.f32 %v148, %v139
    %v153 = vmul.f32 %v151, %v139
    %v154 = vadd.f32 %v152, 1e-05
    %v155 = vadd.f32 %v153, 1e-05
    %v156 = vrsqrt.pop %v154
    %v157 = vrsqrt.pop %v155
    %v158 = vmul.f32 %v142, %v156
    %v159 = vmul.f32 %v143, %v157
    %v161 = vlaneseq
    %v162 = vshrl.u32 %v161, 7
    %v163 = vsub.s32 0, %v162
    %v164 = vrot.slane %v105, %v163
    %v166 = vmul.f32 %v158, %v164
    %v167 = vmul.f32 %v159, %v164
    %v169 = vlaneseq
    %v170 = vshrl.u32 %v169, 7
    %v171 = vsub.s32 0, %v170
    %v172 = vrot.slane %v106, %v171
    %v174 = vadd.f32 %v166, %v172
    %v175 = vadd.f32 %v167, %v172
    %v176 = vpack.c.bf16 %v175, %v174
    %v181 = vunpack.c.l.b16 %v109
    %v182 = vunpack.c.l.b16 %v110
    %v183 = vunpack.c.l.b16 %v111
    %v184 = vunpack.c.l.b16 %v112
    %v185 = vpack.c.b16 %v182, %v181
    %v186 = vpack.c.b16 %v184, %v183
    %v190 = vsel %vm132, %v176, 0
    %192 = vmatprep.subr.bf16.mxu0 0
    %193 = vmatpush1.bf16.msra.mxu0 0
    %194 = vmatprep.subr.bf16.mxu0 0
    %195 = vmatpush1.bf16.msra.mxu0 0
    %196 = vmatprep.subr.bf16.mxu0 0
    %197 = vmatpush1.bf16.msra.mxu0 0
    %198 = vmatprep.subr.bf16.mxu0 0
    %199 = vmatpush1.bf16.msra.mxu0 0
    %200 = vmatprep.subr.bf16.mxu0 0
    %201 = vmatpush1.bf16.msra.mxu0 0
    %202 = vmatprep.subr.bf16.mxu0 0
    %203 = vmatpush1.bf16.msra.mxu0 0
    %204 = vmatprep.subr.bf16.mxu0 0
    %205 = vmatpush1.bf16.msra.mxu0 %v186
    %206 = vmatprep.subr.bf16.mxu0 0
    %207 = vmatpush1.bf16.msra.mxu0 %v185
    %208 = vmatprep.subr.bf16.mxu0 0
    %209 = vmatpush2.bf16.msra.mxu0 0
    %210 = vmatprep.subr.bf16.mxu0 0
    %211 = vmatpush2.bf16.msra.mxu0 0
    %212 = vmatprep.subr.bf16.mxu0 0
    %213 = vmatpush2.bf16.msra.mxu0 0
    %214 = vmatprep.subr.bf16.mxu0 0
    %215 = vmatpush2.bf16.msra.mxu0 0
    %216 = vmatprep.subr.bf16.mxu0 0
    %217 = vmatpush2.bf16.msra.mxu0 0
    %218 = vmatprep.subr.bf16.mxu0 0
    %219 = vmatpush2.bf16.msra.mxu0 0
    %220 = vmatprep.subr.bf16.mxu0 0
    %221 = vmatpush2.bf16.msra.mxu0 0
    %222 = vmatprep.subr.bf16.mxu0 0
    %223 = vmatpush2.bf16.msra.mxu0 0
    %224 = vmatprep.mubr.bf16.mxu0 0
    %225 = vmatmul.mubr.bf16.gmra.mxu0 %v190
    %v226 = vpop.f32.mrf.mxu0
    %v227 = vadd.f32 0.0, %v226
    %v228 = vpop.f32.mrf.mxu0
    %v229 = vpop.f32.mrf.mxu0
    %v230 = vadd.f32 0.0, %v229
    %v231 = vpop.f32.mrf.mxu0
    %232 = vdwg.mxu0
    %v233 = vpack.c.bf16 %v227, %v227
    %v234 = vpack.c.bf16 %v230, %v230
    %236 = vrot.lane.b32.xlu0 %v233, 96
    %v237 = vpop.permute.xlu0 %236
    %vm238 = vcmask 64512
    %v240 = vsel %vm238, %v233, 0
    %v243 = vsel %vm238, %v237, 0
    %245 = vmatprep.subr.bf16.mxu0 0
    %246 = vmatpush1.bf16.xpose.msra.mxu0 0
    %247 = vmatprep.subr.bf16.mxu0 0
    %248 = vmatpush1.bf16.xpose.msra.mxu0 0
    %249 = vmatprep.subr.bf16.mxu0 0
    %250 = vmatpush1.bf16.xpose.msra.mxu0 0
    %251 = vmatprep.subr.bf16.mxu0 0
    %252 = vmatpush1.bf16.xpose.msra.mxu0 0
    %253 = vmatprep.subr.bf16.mxu0 0
    %254 = vmatpush1.bf16.xpose.msra.mxu0 0
    %255 = vmatprep.subr.bf16.mxu0 0
    %256 = vmatpush1.bf16.xpose.msra.mxu0 0
    %257 = vmatprep.subr.bf16.mxu0 0
    %258 = vmatpush1.bf16.xpose.msra.mxu0 0
    %259 = vmatprep.subr.bf16.mxu0 0
    %260 = vmatpush1.bf16.xpose.msra.mxu0 %v243
    %261 = vmatprep.subr.bf16.mxu0 0
    %262 = vmatpush2.bf16.xpose.msra.mxu0 0
    %263 = vmatprep.subr.bf16.mxu0 0
    %264 = vmatpush2.bf16.xpose.msra.mxu0 0
    %265 = vmatprep.subr.bf16.mxu0 0
    %266 = vmatpush2.bf16.xpose.msra.mxu0 0
    %267 = vmatprep.subr.bf16.mxu0 0
    %268 = vmatpush2.bf16.xpose.msra.mxu0 0
    %269 = vmatprep.subr.bf16.mxu0 0
    %270 = vmatpush2.bf16.xpose.msra.mxu0 0
    %271 = vmatprep.subr.bf16.mxu0 0
    %272 = vmatpush2.bf16.xpose.msra.mxu0 0
    %273 = vmatprep.subr.bf16.mxu0 0
    %274 = vmatpush2.bf16.xpose.msra.mxu0 0
    %275 = vmatprep.subr.bf16.mxu0 0
    %276 = vmatpush2.bf16.xpose.msra.mxu0 0
    %277 = vmatprep.mubr.bf16.mxu0 0
    %278 = vmatmul.mubr.bf16.gmra.mxu0 %v240
    %v279 = vpop.f32.mrf.mxu0
    %v280 = vadd.f32 0.0, %v279
    %v281 = vpop.f32.mrf.mxu0
    %v282 = vpop.f32.mrf.mxu0
    %v283 = vpop.f32.mrf.mxu0
    %284 = vdwg.mxu0
    %286 = vrot.lane.b32.xlu0 %v234, 96
    %v287 = vpop.permute.xlu0 %286
    %v289 = vsel %vm238, %v234, 0
    %v292 = vsel %vm238, %v287, 0
    %294 = vmatprep.subr.bf16.mxu0 0
    %295 = vmatpush1.bf16.xpose.msra.mxu0 0
    %296 = vmatprep.subr.bf16.mxu0 0
    %297 = vmatpush1.bf16.xpose.msra.mxu0 0
    %298 = vmatprep.subr.bf16.mxu0 0
    %299 = vmatpush1.bf16.xpose.msra.mxu0 0
    %300 = vmatprep.subr.bf16.mxu0 0
    %301 = vmatpush1.bf16.xpose.msra.mxu0 0
    %302 = vmatprep.subr.bf16.mxu0 0
    %303 = vmatpush1.bf16.xpose.msra.mxu0 0
    %304 = vmatprep.subr.bf16.mxu0 0
    %305 = vmatpush1.bf16.xpose.msra.mxu0 0
    %306 = vmatprep.subr.bf16.mxu0 0
    %307 = vmatpush1.bf16.xpose.msra.mxu0 0
    %308 = vmatprep.subr.bf16.mxu0 0
    %309 = vmatpush1.bf16.xpose.msra.mxu0 %v292
    %310 = vmatprep.subr.bf16.mxu0 0
    %311 = vmatpush2.bf16.xpose.msra.mxu0 0
    %312 = vmatprep.subr.bf16.mxu0 0
    %313 = vmatpush2.bf16.xpose.msra.mxu0 0
    %314 = vmatprep.subr.bf16.mxu0 0
    %315 = vmatpush2.bf16.xpose.msra.mxu0 0
    %316 = vmatprep.subr.bf16.mxu0 0
    %317 = vmatpush2.bf16.xpose.msra.mxu0 0
    %318 = vmatprep.subr.bf16.mxu0 0
    %319 = vmatpush2.bf16.xpose.msra.mxu0 0
    %320 = vmatprep.subr.bf16.mxu0 0
    %321 = vmatpush2.bf16.xpose.msra.mxu0 0
    %322 = vmatprep.subr.bf16.mxu0 0
    %323 = vmatpush2.bf16.xpose.msra.mxu0 0
    %324 = vmatprep.subr.bf16.mxu0 0
    %325 = vmatpush2.bf16.xpose.msra.mxu0 0
    %326 = vmatprep.mubr.bf16.mxu0 0
    %327 = vmatmul.mubr.bf16.gmra.mxu0 %v289
    %v328 = vpop.f32.mrf.mxu0
    %v329 = vadd.f32 0.0, %v328
    %v330 = vpop.f32.mrf.mxu0
    %v331 = vpop.f32.mrf.mxu0
    %v332 = vpop.f32.mrf.mxu0
    %333 = vdwg.mxu0
    %v334 = vmul.f32 %v280, 0.35355338
    %v335 = vmul.f32 %v329, 0.35355338
    %v336 = vsel %vm238, %v334, -inf
    %337 = vmax.xlane.f32.xlu0 %v336
    %v338 = vpop.xlane.xlu0 %337
    %v339 = vsel %vm238, %v335, -inf
    %340 = vmax.xlane.f32.xlu0 %v339
    %v341 = vpop.xlane.xlu0 %340
    %v342 = vsub.f32 %v334, %v338
    %v343 = vsub.f32 %v335, %v341
    %v344 = vmul.f32 %v342, 1.442695
    %v345 = vpow.pop %v344
    %v346 = vmul.f32 %v343, 1.442695
    %v347 = vpow.pop %v346
    %v348 = vsel %vm238, %v345, 0.0
    %349 = vadd.xlane.f32.xlu0 %v348
    %v350 = vpop.xlane.xlu0 %349
    %v351 = vsel %vm238, %v347, 0.0
    %352 = vadd.xlane.f32.xlu0 %v351
    %v353 = vpop.xlane.xlu0 %352
    %v354 = vrcp.pop %v350
    %v355 = vrcp.pop %v353
    %v356 = vmul.f32 %v345, %v354
    %v357 = vmul.f32 %v347, %v355
    %v358 = vpack.c.bf16 %v356, %v356
    %v359 = vpack.c.bf16 %v357, %v357
    %360 = vrot.lane.b32.xlu0 %v233, 64
    %v361 = vpop.permute.xlu0 %360
    %v363 = vsel %vm238, %v358, 0
    %vm365 = vcmask 1043456
    %v367 = vsel %vm365, %v361, 0
    %369 = vmatprep.subr.bf16.mxu0 0
    %370 = vmatpush1.bf16.msra.mxu0 0
    %371 = vmatprep.subr.bf16.mxu0 0
    %372 = vmatpush1.bf16.msra.mxu0 0
    %373 = vmatprep.subr.bf16.mxu0 0
    %374 = vmatpush1.bf16.msra.mxu0 0
    %375 = vmatprep.subr.bf16.mxu0 0
    %376 = vmatpush1.bf16.msra.mxu0 0
    %377 = vmatprep.subr.bf16.mxu0 0
    %378 = vmatpush1.bf16.msra.mxu0 0
    %379 = vmatprep.subr.bf16.mxu0 0
    %380 = vmatpush1.bf16.msra.mxu0 0
    %381 = vmatprep.subr.bf16.mxu0 0
    %382 = vmatpush1.bf16.msra.mxu0 0
    %383 = vmatprep.subr.bf16.mxu0 0
    %384 = vmatpush1.bf16.msra.mxu0 %v367
    %385 = vmatprep.subr.bf16.mxu0 0
    %386 = vmatpush2.bf16.msra.mxu0 0
    %387 = vmatprep.subr.bf16.mxu0 0
    %388 = vmatpush2.bf16.msra.mxu0 0
    %389 = vmatprep.subr.bf16.mxu0 0
    %390 = vmatpush2.bf16.msra.mxu0 0
    %391 = vmatprep.subr.bf16.mxu0 0
    %392 = vmatpush2.bf16.msra.mxu0 0
    %393 = vmatprep.subr.bf16.mxu0 0
    %394 = vmatpush2.bf16.msra.mxu0 0
    %395 = vmatprep.subr.bf16.mxu0 0
    %396 = vmatpush2.bf16.msra.mxu0 0
    %397 = vmatprep.subr.bf16.mxu0 0
    %398 = vmatpush2.bf16.msra.mxu0 0
    %399 = vmatprep.subr.bf16.mxu0 0
    %400 = vmatpush2.bf16.msra.mxu0 0
    %401 = vmatprep.mubr.bf16.mxu0 0
    %402 = vmatmul.mubr.bf16.gmra.mxu0 %v363
    %v403 = vpop.f32.mrf.mxu0
    %v404 = vadd.f32 0.0, %v403
    %v405 = vpop.f32.mrf.mxu0
    %v406 = vpop.f32.mrf.mxu0
    %v407 = vpop.f32.mrf.mxu0
    %408 = vdwg.mxu0
    %409 = vrot.lane.b32.xlu0 %v234, 64
    %v410 = vpop.permute.xlu0 %409
    %v412 = vsel %vm238, %v359, 0
    %v415 = vsel %vm365, %v410, 0
    %417 = vmatprep.subr.bf16.mxu0 0
    %418 = vmatpush1.bf16.msra.mxu0 0
    %419 = vmatprep.subr.bf16.mxu0 0
    %420 = vmatpush1.bf16.msra.mxu0 0
    %421 = vmatprep.subr.bf16.mxu0 0
    %422 = vmatpush1.bf16.msra.mxu0 0
    %423 = vmatprep.subr.bf16.mxu0 0
    %424 = vmatpush1.bf16.msra.mxu0 0
    %425 = vmatprep.subr.bf16.mxu0 0
    %426 = vmatpush1.bf16.msra.mxu0 0
    %427 = vmatprep.subr.bf16.mxu0 0
    %428 = vmatpush1.bf16.msra.mxu0 0
    %429 = vmatprep.subr.bf16.mxu0 0
    %430 = vmatpush1.bf16.msra.mxu0 0
    %431 = vmatprep.subr.bf16.mxu0 0
    %432 = vmatpush1.bf16.msra.mxu0 %v415
    %433 = vmatprep.subr.bf16.mxu0 0
    %434 = vmatpush2.bf16.msra.mxu0 0
    %435 = vmatprep.subr.bf16.mxu0 0
    %436 = vmatpush2.bf16.msra.mxu0 0
    %437 = vmatprep.subr.bf16.mxu0 0
    %438 = vmatpush2.bf16.msra.mxu0 0
    %439 = vmatprep.subr.bf16.mxu0 0
    %440 = vmatpush2.bf16.msra.mxu0 0
    %441 = vmatprep.subr.bf16.mxu0 0
    %442 = vmatpush2.bf16.msra.mxu0 0
    %443 = vmatprep.subr.bf16.mxu0 0
    %444 = vmatpush2.bf16.msra.mxu0 0
    %445 = vmatprep.subr.bf16.mxu0 0
    %446 = vmatpush2.bf16.msra.mxu0 0
    %447 = vmatprep.subr.bf16.mxu0 0
    %448 = vmatpush2.bf16.msra.mxu0 0
    %449 = vmatprep.mubr.bf16.mxu0 0
    %450 = vmatmul.mubr.bf16.gmra.mxu0 %v412
    %v451 = vpop.f32.mrf.mxu0
    %v452 = vadd.f32 0.0, %v451
    %v453 = vpop.f32.mrf.mxu0
    %v454 = vpop.f32.mrf.mxu0
    %v455 = vpop.f32.mrf.mxu0
    %456 = vdwg.mxu0
    %v457 = vpack.c.bf16 %v452, %v404
    %458 = vrot.lane.b32.xlu0 %v233, 120
    %v459 = vpop.permute.xlu0 %458
    %460 = vrot.lane.b32.xlu0 %v233, 88
    %v461 = vpop.permute.xlu0 %460
    %v463 = vsel %vm238, %v459, 0
    %v466 = vsel %vm238, %v461, 0
    %468 = vmatprep.subr.bf16.mxu0 0
    %469 = vmatpush1.bf16.xpose.msra.mxu0 0
    %470 = vmatprep.subr.bf16.mxu0 0
    %471 = vmatpush1.bf16.xpose.msra.mxu0 0
    %472 = vmatprep.subr.bf16.mxu0 0
    %473 = vmatpush1.bf16.xpose.msra.mxu0 0
    %474 = vmatprep.subr.bf16.mxu0 0
    %475 = vmatpush1.bf16.xpose.msra.mxu0 0
    %476 = vmatprep.subr.bf16.mxu0 0
    %477 = vmatpush1.bf16.xpose.msra.mxu0 0
    %478 = vmatprep.subr.bf16.mxu0 0
    %479 = vmatpush1.bf16.xpose.msra.mxu0 0
    %480 = vmatprep.subr.bf16.mxu0 0
    %481 = vmatpush1.bf16.xpose.msra.mxu0 0
    %482 = vmatprep.subr.bf16.mxu0 0
    %483 = vmatpush1.bf16.xpose.msra.mxu0 %v466
    %484 = vmatprep.subr.bf16.mxu0 0
    %485 = vmatpush2.bf16.xpose.msra.mxu0 0
    %486 = vmatprep.subr.bf16.mxu0 0
    %487 = vmatpush2.bf16.xpose.msra.mxu0 0
    %488 = vmatprep.subr.bf16.mxu0 0
    %489 = vmatpush2.bf16.xpose.msra.mxu0 0
    %490 = vmatprep.subr.bf16.mxu0 0
    %491 = vmatpush2.bf16.xpose.msra.mxu0 0
    %492 = vmatprep.subr.bf16.mxu0 0
    %493 = vmatpush2.bf16.xpose.msra.mxu0 0
    %494 = vmatprep.subr.bf16.mxu0 0
    %495 = vmatpush2.bf16.xpose.msra.mxu0 0
    %496 = vmatprep.subr.bf16.mxu0 0
    %497 = vmatpush2.bf16.xpose.msra.mxu0 0
    %498 = vmatprep.subr.bf16.mxu0 0
    %499 = vmatpush2.bf16.xpose.msra.mxu0 0
    %500 = vmatprep.mubr.bf16.mxu0 0
    %501 = vmatmul.mubr.bf16.gmra.mxu0 %v463
    %v502 = vpop.f32.mrf.mxu0
    %v503 = vadd.f32 0.0, %v502
    %v504 = vpop.f32.mrf.mxu0
    %v505 = vpop.f32.mrf.mxu0
    %v506 = vpop.f32.mrf.mxu0
    %507 = vdwg.mxu0
    %508 = vrot.lane.b32.xlu0 %v234, 120
    %v509 = vpop.permute.xlu0 %508
    %510 = vrot.lane.b32.xlu0 %v234, 88
    %v511 = vpop.permute.xlu0 %510
    %v513 = vsel %vm238, %v509, 0
    %v516 = vsel %vm238, %v511, 0
    %518 = vmatprep.subr.bf16.mxu0 0
    %519 = vmatpush1.bf16.xpose.msra.mxu0 0
    %520 = vmatprep.subr.bf16.mxu0 0
    %521 = vmatpush1.bf16.xpose.msra.mxu0 0
    %522 = vmatprep.subr.bf16.mxu0 0
    %523 = vmatpush1.bf16.xpose.msra.mxu0 0
    %524 = vmatprep.subr.bf16.mxu0 0
    %525 = vmatpush1.bf16.xpose.msra.mxu0 0
    %526 = vmatprep.subr.bf16.mxu0 0
    %527 = vmatpush1.bf16.xpose.msra.mxu0 0
    %528 = vmatprep.subr.bf16.mxu0 0
    %529 = vmatpush1.bf16.xpose.msra.mxu0 0
    %530 = vmatprep.subr.bf16.mxu0 0
    %531 = vmatpush1.bf16.xpose.msra.mxu0 0
    %532 = vmatprep.subr.bf16.mxu0 0
    %533 = vmatpush1.bf16.xpose.msra.mxu0 %v516
    %534 = vmatprep.subr.bf16.mxu0 0
    %535 = vmatpush2.bf16.xpose.msra.mxu0 0
    %536 = vmatprep.subr.bf16.mxu0 0
    %537 = vmatpush2.bf16.xpose.msra.mxu0 0
    %538 = vmatprep.subr.bf16.mxu0 0
    %539 = vmatpush2.bf16.xpose.msra.mxu0 0
    %540 = vmatprep.subr.bf16.mxu0 0
    %541 = vmatpush2.bf16.xpose.msra.mxu0 0
    %542 = vmatprep.subr.bf16.mxu0 0
    %543 = vmatpush2.bf16.xpose.msra.mxu0 0
    %544 = vmatprep.subr.bf16.mxu0 0
    %545 = vmatpush2.bf16.xpose.msra.mxu0 0
    %546 = vmatprep.subr.bf16.mxu0 0
    %547 = vmatpush2.bf16.xpose.msra.mxu0 0
    %548 = vmatprep.subr.bf16.mxu0 0
    %549 = vmatpush2.bf16.xpose.msra.mxu0 0
    %550 = vmatprep.mubr.bf16.mxu0 0
    %551 = vmatmul.mubr.bf16.gmra.mxu0 %v513
    %v552 = vpop.f32.mrf.mxu0
    %v553 = vadd.f32 0.0, %v552
    %v554 = vpop.f32.mrf.mxu0
    %v555 = vpop.f32.mrf.mxu0
    %v556 = vpop.f32.mrf.mxu0
    %557 = vdwg.mxu0
    %v558 = vmul.f32 %v503, 0.35355338
    %v559 = vmul.f32 %v553, 0.35355338
    %v560 = vsel %vm238, %v558, -inf
    %561 = vmax.xlane.f32.xlu0 %v560
    %v562 = vpop.xlane.xlu0 %561
    %v563 = vsel %vm238, %v559, -inf
    %564 = vmax.xlane.f32.xlu0 %v563
    %v565 = vpop.xlane.xlu0 %564
    %v566 = vsub.f32 %v558, %v562
    %v567 = vsub.f32 %v559, %v565
    %v568 = vmul.f32 %v566, 1.442695
    %v569 = vpow.pop %v568
    %v570 = vmul.f32 %v567, 1.442695
    %v571 = vpow.pop %v570
    %v572 = vsel %vm238, %v569, 0.0
    %573 = vadd.xlane.f32.xlu0 %v572
    %v574 = vpop.xlane.xlu0 %573
    %v575 = vsel %vm238, %v571, 0.0
    %576 = vadd.xlane.f32.xlu0 %v575
    %v577 = vpop.xlane.xlu0 %576
    %v578 = vrcp.pop %v574
    %v579 = vrcp.pop %v577
    %v580 = vmul.f32 %v569, %v578
    %v581 = vmul.f32 %v571, %v579
    %v582 = vpack.c.bf16 %v580, %v580
    %v583 = vpack.c.bf16 %v581, %v581
    %584 = vrot.lane.b32.xlu0 %v233, 56
    %v585 = vpop.permute.xlu0 %584
    %v587 = vsel %vm238, %v582, 0
    %v590 = vsel %vm365, %v585, 0
    %592 = vmatprep.subr.bf16.mxu0 0
    %593 = vmatpush1.bf16.msra.mxu0 0
    %594 = vmatprep.subr.bf16.mxu0 0
    %595 = vmatpush1.bf16.msra.mxu0 0
    %596 = vmatprep.subr.bf16.mxu0 0
    %597 = vmatpush1.bf16.msra.mxu0 0
    %598 = vmatprep.subr.bf16.mxu0 0
    %599 = vmatpush1.bf16.msra.mxu0 0
    %600 = vmatprep.subr.bf16.mxu0 0
    %601 = vmatpush1.bf16.msra.mxu0 0
    %602 = vmatprep.subr.bf16.mxu0 0
    %603 = vmatpush1.bf16.msra.mxu0 0
    %604 = vmatprep.subr.bf16.mxu0 0
    %605 = vmatpush1.bf16.msra.mxu0 0
    %606 = vmatprep.subr.bf16.mxu0 0
    %607 = vmatpush1.bf16.msra.mxu0 %v590
    %608 = vmatprep.subr.bf16.mxu0 0
    %609 = vmatpush2.bf16.msra.mxu0 0
    %610 = vmatprep.subr.bf16.mxu0 0
    %611 = vmatpush2.bf16.msra.mxu0 0
    %612 = vmatprep.subr.bf16.mxu0 0
    %613 = vmatpush2.bf16.msra.mxu0 0
    %614 = vmatprep.subr.bf16.mxu0 0
    %615 = vmatpush2.bf16.msra.mxu0 0
    %616 = vmatprep.subr.bf16.mxu0 0
    %617 = vmatpush2.bf16.msra.mxu0 0
    %618 = vmatprep.subr.bf16.mxu0 0
    %619 = vmatpush2.bf16.msra.mxu0 0
    %620 = vmatprep.subr.bf16.mxu0 0
    %621 = vmatpush2.bf16.msra.mxu0 0
    %622 = vmatprep.subr.bf16.mxu0 0
    %623 = vmatpush2.bf16.msra.mxu0 0
    %624 = vmatprep.mubr.bf16.mxu0 0
    %625 = vmatmul.mubr.bf16.gmra.mxu0 %v587
    %v626 = vpop.f32.mrf.mxu0
    %v627 = vadd.f32 0.0, %v626
    %v628 = vpop.f32.mrf.mxu0
    %v629 = vpop.f32.mrf.mxu0
    %v630 = vpop.f32.mrf.mxu0
    %631 = vdwg.mxu0
    %632 = vrot.lane.b32.xlu0 %v234, 56
    %v633 = vpop.permute.xlu0 %632
    %v635 = vsel %vm238, %v583, 0
    %v638 = vsel %vm365, %v633, 0
    %640 = vmatprep.subr.bf16.mxu0 0
    %641 = vmatpush1.bf16.msra.mxu0 0
    %642 = vmatprep.subr.bf16.mxu0 0
    %643 = vmatpush1.bf16.msra.mxu0 0
    %644 = vmatprep.subr.bf16.mxu0 0
    %645 = vmatpush1.bf16.msra.mxu0 0
    %646 = vmatprep.subr.bf16.mxu0 0
    %647 = vmatpush1.bf16.msra.mxu0 0
    %648 = vmatprep.subr.bf16.mxu0 0
    %649 = vmatpush1.bf16.msra.mxu0 0
    %650 = vmatprep.subr.bf16.mxu0 0
    %651 = vmatpush1.bf16.msra.mxu0 0
    %652 = vmatprep.subr.bf16.mxu0 0
    %653 = vmatpush1.bf16.msra.mxu0 0
    %654 = vmatprep.subr.bf16.mxu0 0
    %655 = vmatpush1.bf16.msra.mxu0 %v638
    %656 = vmatprep.subr.bf16.mxu0 0
    %657 = vmatpush2.bf16.msra.mxu0 0
    %658 = vmatprep.subr.bf16.mxu0 0
    %659 = vmatpush2.bf16.msra.mxu0 0
    %660 = vmatprep.subr.bf16.mxu0 0
    %661 = vmatpush2.bf16.msra.mxu0 0
    %662 = vmatprep.subr.bf16.mxu0 0
    %663 = vmatpush2.bf16.msra.mxu0 0
    %664 = vmatprep.subr.bf16.mxu0 0
    %665 = vmatpush2.bf16.msra.mxu0 0
    %666 = vmatprep.subr.bf16.mxu0 0
    %667 = vmatpush2.bf16.msra.mxu0 0
    %668 = vmatprep.subr.bf16.mxu0 0
    %669 = vmatpush2.bf16.msra.mxu0 0
    %670 = vmatprep.subr.bf16.mxu0 0
    %671 = vmatpush2.bf16.msra.mxu0 0
    %672 = vmatprep.mubr.bf16.mxu0 0
    %673 = vmatmul.mubr.bf16.gmra.mxu0 %v635
    %v674 = vpop.f32.mrf.mxu0
    %v675 = vadd.f32 0.0, %v674
    %v676 = vpop.f32.mrf.mxu0
    %v677 = vpop.f32.mrf.mxu0
    %v678 = vpop.f32.mrf.mxu0
    %679 = vdwg.mxu0
    %v680 = vpack.c.bf16 %v675, %v627
    %v682 = vsel %vm238, %v680, 0
    %v685 = vsel %vm365, %v114, 0
    %687 = vmatprep.subr.bf16.mxu0 0
    %688 = vmatpush1.bf16.msra.mxu0 0
    %689 = vmatprep.subr.bf16.mxu0 0
    %690 = vmatpush1.bf16.msra.mxu0 0
    %691 = vmatprep.subr.bf16.mxu0 0
    %692 = vmatpush1.bf16.msra.mxu0 0
    %693 = vmatprep.subr.bf16.mxu0 0
    %694 = vmatpush1.bf16.msra.mxu0 0
    %695 = vmatprep.subr.bf16.mxu0 0
    %696 = vmatpush1.bf16.msra.mxu0 0
    %697 = vmatprep.subr.bf16.mxu0 0
    %698 = vmatpush1.bf16.msra.mxu0 0
    %699 = vmatprep.subr.bf16.mxu0 0
    %700 = vmatpush1.bf16.msra.mxu0 0
    %701 = vmatprep.subr.bf16.mxu0 0
    %702 = vmatpush1.bf16.msra.mxu0 %v685
    %703 = vmatprep.subr.bf16.mxu0 0
    %704 = vmatpush2.bf16.msra.mxu0 0
    %705 = vmatprep.subr.bf16.mxu0 0
    %706 = vmatpush2.bf16.msra.mxu0 0
    %707 = vmatprep.subr.bf16.mxu0 0
    %708 = vmatpush2.bf16.msra.mxu0 0
    %709 = vmatprep.subr.bf16.mxu0 0
    %710 = vmatpush2.bf16.msra.mxu0 0
    %711 = vmatprep.subr.bf16.mxu0 0
    %712 = vmatpush2.bf16.msra.mxu0 0
    %713 = vmatprep.subr.bf16.mxu0 0
    %714 = vmatpush2.bf16.msra.mxu0 0
    %715 = vmatprep.subr.bf16.mxu0 0
    %716 = vmatpush2.bf16.msra.mxu0 0
    %717 = vmatprep.subr.bf16.mxu0 0
    %718 = vmatpush2.bf16.msra.mxu0 0
    %719 = vmatprep.mubr.bf16.mxu0 0
    %720 = vmatmul.mubr.bf16.gmra.mxu0 %v682
    %v721 = vpop.f32.mrf.mxu0
    %v722 = vadd.f32 0.0, %v721
    %v723 = vpop.f32.mrf.mxu0
    %v724 = vpop.f32.mrf.mxu0
    %v725 = vadd.f32 0.0, %v724
    %v726 = vpop.f32.mrf.mxu0
    %727 = vdwg.mxu0
    %v729 = vsel %vm238, %v457, 0
    %v732 = vsel %vm365, %v113, 0
    %734 = vmatprep.subr.bf16.mxu0 0
    %735 = vmatpush1.bf16.msra.mxu0 0
    %736 = vmatprep.subr.bf16.mxu0 0
    %737 = vmatpush1.bf16.msra.mxu0 0
    %738 = vmatprep.subr.bf16.mxu0 0
    %739 = vmatpush1.bf16.msra.mxu0 0
    %740 = vmatprep.subr.bf16.mxu0 0
    %741 = vmatpush1.bf16.msra.mxu0 0
    %742 = vmatprep.subr.bf16.mxu0 0
    %743 = vmatpush1.bf16.msra.mxu0 0
    %744 = vmatprep.subr.bf16.mxu0 0
    %745 = vmatpush1.bf16.msra.mxu0 0
    %746 = vmatprep.subr.bf16.mxu0 0
    %747 = vmatpush1.bf16.msra.mxu0 0
    %748 = vmatprep.subr.bf16.mxu0 0
    %749 = vmatpush1.bf16.msra.mxu0 %v732
    %750 = vmatprep.subr.bf16.mxu0 0
    %751 = vmatpush2.bf16.msra.mxu0 0
    %752 = vmatprep.subr.bf16.mxu0 0
    %753 = vmatpush2.bf16.msra.mxu0 0
    %754 = vmatprep.subr.bf16.mxu0 0
    %755 = vmatpush2.bf16.msra.mxu0 0
    %756 = vmatprep.subr.bf16.mxu0 0
    %757 = vmatpush2.bf16.msra.mxu0 0
    %758 = vmatprep.subr.bf16.mxu0 0
    %759 = vmatpush2.bf16.msra.mxu0 0
    %760 = vmatprep.subr.bf16.mxu0 0
    %761 = vmatpush2.bf16.msra.mxu0 0
    %762 = vmatprep.subr.bf16.mxu0 0
    %763 = vmatpush2.bf16.msra.mxu0 0
    %764 = vmatprep.subr.bf16.mxu0 0
    %765 = vmatpush2.bf16.msra.mxu0 0
    %766 = vmatprep.mubr.bf16.mxu0 0
    %767 = vmatmul.mubr.bf16.gmra.mxu0 %v729
    %v768 = vpop.f32.mrf.mxu0
    %v769 = vadd.f32 %v722, %v768
    %v770 = vpop.f32.mrf.mxu0
    %v771 = vpop.f32.mrf.mxu0
    %v772 = vadd.f32 %v725, %v771
    %v773 = vpop.f32.mrf.mxu0
    %774 = vdwg.mxu0
    %775 = vrot.lane.b32.xlu0 %v233, 112
    %v776 = vpop.permute.xlu0 %775
    %777 = vrot.lane.b32.xlu0 %v233, 80
    %v778 = vpop.permute.xlu0 %777
    %v780 = vsel %vm238, %v776, 0
    %v783 = vsel %vm238, %v778, 0
    %785 = vmatprep.subr.bf16.mxu0 0
    %786 = vmatpush1.bf16.xpose.msra.mxu0 0
    %787 = vmatprep.subr.bf16.mxu0 0
    %788 = vmatpush1.bf16.xpose.msra.mxu0 0
    %789 = vmatprep.subr.bf16.mxu0 0
    %790 = vmatpush1.bf16.xpose.msra.mxu0 0
    %791 = vmatprep.subr.bf16.mxu0 0
    %792 = vmatpush1.bf16.xpose.msra.mxu0 0
    %793 = vmatprep.subr.bf16.mxu0 0
    %794 = vmatpush1.bf16.xpose.msra.mxu0 0
    %795 = vmatprep.subr.bf16.mxu0 0
    %796 = vmatpush1.bf16.xpose.msra.mxu0 0
    %797 = vmatprep.subr.bf16.mxu0 0
    %798 = vmatpush1.bf16.xpose.msra.mxu0 0
    %799 = vmatprep.subr.bf16.mxu0 0
    %800 = vmatpush1.bf16.xpose.msra.mxu0 %v783
    %801 = vmatprep.subr.bf16.mxu0 0
    %802 = vmatpush2.bf16.xpose.msra.mxu0 0
    %803 = vmatprep.subr.bf16.mxu0 0
    %804 = vmatpush2.bf16.xpose.msra.mxu0 0
    %805 = vmatprep.subr.bf16.mxu0 0
    %806 = vmatpush2.bf16.xpose.msra.mxu0 0
    %807 = vmatprep.subr.bf16.mxu0 0
    %808 = vmatpush2.bf16.xpose.msra.mxu0 0
    %809 = vmatprep.subr.bf16.mxu0 0
    %810 = vmatpush2.bf16.xpose.msra.mxu0 0
    %811 = vmatprep.subr.bf16.mxu0 0
    %812 = vmatpush2.bf16.xpose.msra.mxu0 0
    %813 = vmatprep.subr.bf16.mxu0 0
    %814 = vmatpush2.bf16.xpose.msra.mxu0 0
    %815 = vmatprep.subr.bf16.mxu0 0
    %816 = vmatpush2.bf16.xpose.msra.mxu0 0
    %817 = vmatprep.mubr.bf16.mxu0 0
    %818 = vmatmul.mubr.bf16.gmra.mxu0 %v780
    %v819 = vpop.f32.mrf.mxu0
    %v820 = vadd.f32 0.0, %v819
    %v821 = vpop.f32.mrf.mxu0
    %v822 = vpop.f32.mrf.mxu0
    %v823 = vpop.f32.mrf.mxu0
    %824 = vdwg.mxu0
    %825 = vrot.lane.b32.xlu0 %v234, 112
    %v826 = vpop.permute.xlu0 %825
    %827 = vrot.lane.b32.xlu0 %v234, 80
    %v828 = vpop.permute.xlu0 %827
    %v830 = vsel %vm238, %v826, 0
    %v833 = vsel %vm238, %v828, 0
    %835 = vmatprep.subr.bf16.mxu0 0
    %836 = vmatpush1.bf16.xpose.msra.mxu0 0
    %837 = vmatprep.subr.bf16.mxu0 0
    %838 = vmatpush1.bf16.xpose.msra.mxu0 0
    %839 = vmatprep.subr.bf16.mxu0 0
    %840 = vmatpush1.bf16.xpose.msra.mxu0 0
    %841 = vmatprep.subr.bf16.mxu0 0
    %842 = vmatpush1.bf16.xpose.msra.mxu0 0
    %843 = vmatprep.subr.bf16.mxu0 0
    %844 = vmatpush1.bf16.xpose.msra.mxu0 0
    %845 = vmatprep.subr.bf16.mxu0 0
    %846 = vmatpush1.bf16.xpose.msra.mxu0 0
    %847 = vmatprep.subr.bf16.mxu0 0
    %848 = vmatpush1.bf16.xpose.msra.mxu0 0
    %849 = vmatprep.subr.bf16.mxu0 0
    %850 = vmatpush1.bf16.xpose.msra.mxu0 %v833
    %851 = vmatprep.subr.bf16.mxu0 0
    %852 = vmatpush2.bf16.xpose.msra.mxu0 0
    %853 = vmatprep.subr.bf16.mxu0 0
    %854 = vmatpush2.bf16.xpose.msra.mxu0 0
    %855 = vmatprep.subr.bf16.mxu0 0
    %856 = vmatpush2.bf16.xpose.msra.mxu0 0
    %857 = vmatprep.subr.bf16.mxu0 0
    %858 = vmatpush2.bf16.xpose.msra.mxu0 0
    %859 = vmatprep.subr.bf16.mxu0 0
    %860 = vmatpush2.bf16.xpose.msra.mxu0 0
    %861 = vmatprep.subr.bf16.mxu0 0
    %862 = vmatpush2.bf16.xpose.msra.mxu0 0
    %863 = vmatprep.subr.bf16.mxu0 0
    %864 = vmatpush2.bf16.xpose.msra.mxu0 0
    %865 = vmatprep.subr.bf16.mxu0 0
    %866 = vmatpush2.bf16.xpose.msra.mxu0 0
    %867 = vmatprep.mubr.bf16.mxu0 0
    %868 = vmatmul.mubr.bf16.gmra.mxu0 %v830
    %v869 = vpop.f32.mrf.mxu0
    %v870 = vadd.f32 0.0, %v869
    %v871 = vpop.f32.mrf.mxu0
    %v872 = vpop.f32.mrf.mxu0
    %v873 = vpop.f32.mrf.mxu0
    %874 = vdwg.mxu0
    %v875 = vmul.f32 %v820, 0.35355338
    %v876 = vmul.f32 %v870, 0.35355338
    %v877 = vsel %vm238, %v875, -inf
    %878 = vmax.xlane.f32.xlu0 %v877
    %v879 = vpop.xlane.xlu0 %878
    %v880 = vsel %vm238, %v876, -inf
    %881 = vmax.xlane.f32.xlu0 %v880
    %v882 = vpop.xlane.xlu0 %881
    %v883 = vsub.f32 %v875, %v879
    %v884 = vsub.f32 %v876, %v882
    %v885 = vmul.f32 %v883, 1.442695
    %v886 = vpow.pop %v885
    %v887 = vmul.f32 %v884, 1.442695
    %v888 = vpow.pop %v887
    %v889 = vsel %vm238, %v886, 0.0
    %890 = vadd.xlane.f32.xlu0 %v889
    %v891 = vpop.xlane.xlu0 %890
    %v892 = vsel %vm238, %v888, 0.0
    %893 = vadd.xlane.f32.xlu0 %v892
    %v894 = vpop.xlane.xlu0 %893
    %v895 = vrcp.pop %v891
    %v896 = vrcp.pop %v894
    %v897 = vmul.f32 %v886, %v895
    %v898 = vmul.f32 %v888, %v896
    %v899 = vpack.c.bf16 %v897, %v897
    %v900 = vpack.c.bf16 %v898, %v898
    %901 = vrot.lane.b32.xlu0 %v233, 48
    %v902 = vpop.permute.xlu0 %901
    %v904 = vsel %vm238, %v899, 0
    %v907 = vsel %vm365, %v902, 0
    %909 = vmatprep.subr.bf16.mxu0 0
    %910 = vmatpush1.bf16.msra.mxu0 0
    %911 = vmatprep.subr.bf16.mxu0 0
    %912 = vmatpush1.bf16.msra.mxu0 0
    %913 = vmatprep.subr.bf16.mxu0 0
    %914 = vmatpush1.bf16.msra.mxu0 0
    %915 = vmatprep.subr.bf16.mxu0 0
    %916 = vmatpush1.bf16.msra.mxu0 0
    %917 = vmatprep.subr.bf16.mxu0 0
    %918 = vmatpush1.bf16.msra.mxu0 0
    %919 = vmatprep.subr.bf16.mxu0 0
    %920 = vmatpush1.bf16.msra.mxu0 0
    %921 = vmatprep.subr.bf16.mxu0 0
    %922 = vmatpush1.bf16.msra.mxu0 0
    %923 = vmatprep.subr.bf16.mxu0 0
    %924 = vmatpush1.bf16.msra.mxu0 %v907
    %925 = vmatprep.subr.bf16.mxu0 0
    %926 = vmatpush2.bf16.msra.mxu0 0
    %927 = vmatprep.subr.bf16.mxu0 0
    %928 = vmatpush2.bf16.msra.mxu0 0
    %929 = vmatprep.subr.bf16.mxu0 0
    %930 = vmatpush2.bf16.msra.mxu0 0
    %931 = vmatprep.subr.bf16.mxu0 0
    %932 = vmatpush2.bf16.msra.mxu0 0
    %933 = vmatprep.subr.bf16.mxu0 0
    %934 = vmatpush2.bf16.msra.mxu0 0
    %935 = vmatprep.subr.bf16.mxu0 0
    %936 = vmatpush2.bf16.msra.mxu0 0
    %937 = vmatprep.subr.bf16.mxu0 0
    %938 = vmatpush2.bf16.msra.mxu0 0
    %939 = vmatprep.subr.bf16.mxu0 0
    %940 = vmatpush2.bf16.msra.mxu0 0
    %941 = vmatprep.mubr.bf16.mxu0 0
    %942 = vmatmul.mubr.bf16.gmra.mxu0 %v904
    %v943 = vpop.f32.mrf.mxu0
    %v944 = vadd.f32 0.0, %v943
    %v945 = vpop.f32.mrf.mxu0
    %v946 = vpop.f32.mrf.mxu0
    %v947 = vpop.f32.mrf.mxu0
    %948 = vdwg.mxu0
    %949 = vrot.lane.b32.xlu0 %v234, 48
    %v950 = vpop.permute.xlu0 %949
    %v952 = vsel %vm238, %v900, 0
    %v955 = vsel %vm365, %v950, 0
    %957 = vmatprep.subr.bf16.mxu0 0
    %958 = vmatpush1.bf16.msra.mxu0 0
    %959 = vmatprep.subr.bf16.mxu0 0
    %960 = vmatpush1.bf16.msra.mxu0 0
    %961 = vmatprep.subr.bf16.mxu0 0
    %962 = vmatpush1.bf16.msra.mxu0 0
    %963 = vmatprep.subr.bf16.mxu0 0
    %964 = vmatpush1.bf16.msra.mxu0 0
    %965 = vmatprep.subr.bf16.mxu0 0
    %966 = vmatpush1.bf16.msra.mxu0 0
    %967 = vmatprep.subr.bf16.mxu0 0
    %968 = vmatpush1.bf16.msra.mxu0 0
    %969 = vmatprep.subr.bf16.mxu0 0
    %970 = vmatpush1.bf16.msra.mxu0 0
    %971 = vmatprep.subr.bf16.mxu0 0
    %972 = vmatpush1.bf16.msra.mxu0 %v955
    %973 = vmatprep.subr.bf16.mxu0 0
    %974 = vmatpush2.bf16.msra.mxu0 0
    %975 = vmatprep.subr.bf16.mxu0 0
    %976 = vmatpush2.bf16.msra.mxu0 0
    %977 = vmatprep.subr.bf16.mxu0 0
    %978 = vmatpush2.bf16.msra.mxu0 0
    %979 = vmatprep.subr.bf16.mxu0 0
    %980 = vmatpush2.bf16.msra.mxu0 0
    %981 = vmatprep.subr.bf16.mxu0 0
    %982 = vmatpush2.bf16.msra.mxu0 0
    %983 = vmatprep.subr.bf16.mxu0 0
    %984 = vmatpush2.bf16.msra.mxu0 0
    %985 = vmatprep.subr.bf16.mxu0 0
    %986 = vmatpush2.bf16.msra.mxu0 0
    %987 = vmatprep.subr.bf16.mxu0 0
    %988 = vmatpush2.bf16.msra.mxu0 0
    %989 = vmatprep.mubr.bf16.mxu0 0
    %990 = vmatmul.mubr.bf16.gmra.mxu0 %v952
    %v991 = vpop.f32.mrf.mxu0
    %v992 = vadd.f32 0.0, %v991
    %v993 = vpop.f32.mrf.mxu0
    %v994 = vpop.f32.mrf.mxu0
    %v995 = vpop.f32.mrf.mxu0
    %996 = vdwg.mxu0
    %v997 = vpack.c.bf16 %v992, %v944
    %v999 = vsel %vm238, %v997, 0
    %v1002 = vsel %vm365, %v115, 0
    %1004 = vmatprep.subr.bf16.mxu0 0
    %1005 = vmatpush1.bf16.msra.mxu0 0
    %1006 = vmatprep.subr.bf16.mxu0 0
    %1007 = vmatpush1.bf16.msra.mxu0 0
    %1008 = vmatprep.subr.bf16.mxu0 0
    %1009 = vmatpush1.bf16.msra.mxu0 0
    %1010 = vmatprep.subr.bf16.mxu0 0
    %1011 = vmatpush1.bf16.msra.mxu0 0
    %1012 = vmatprep.subr.bf16.mxu0 0
    %1013 = vmatpush1.bf16.msra.mxu0 0
    %1014 = vmatprep.subr.bf16.mxu0 0
    %1015 = vmatpush1.bf16.msra.mxu0 0
    %1016 = vmatprep.subr.bf16.mxu0 0
    %1017 = vmatpush1.bf16.msra.mxu0 0
    %1018 = vmatprep.subr.bf16.mxu0 0
    %1019 = vmatpush1.bf16.msra.mxu0 %v1002
    %1020 = vmatprep.subr.bf16.mxu0 0
    %1021 = vmatpush2.bf16.msra.mxu0 0
    %1022 = vmatprep.subr.bf16.mxu0 0
    %1023 = vmatpush2.bf16.msra.mxu0 0
    %1024 = vmatprep.subr.bf16.mxu0 0
    %1025 = vmatpush2.bf16.msra.mxu0 0
    %1026 = vmatprep.subr.bf16.mxu0 0
    %1027 = vmatpush2.bf16.msra.mxu0 0
    %1028 = vmatprep.subr.bf16.mxu0 0
    %1029 = vmatpush2.bf16.msra.mxu0 0
    %1030 = vmatprep.subr.bf16.mxu0 0
    %1031 = vmatpush2.bf16.msra.mxu0 0
    %1032 = vmatprep.subr.bf16.mxu0 0
    %1033 = vmatpush2.bf16.msra.mxu0 0
    %1034 = vmatprep.subr.bf16.mxu0 0
    %1035 = vmatpush2.bf16.msra.mxu0 0
    %1036 = vmatprep.mubr.bf16.mxu0 0
    %1037 = vmatmul.mubr.bf16.gmra.mxu0 %v999
    %v1038 = vpop.f32.mrf.mxu0
    %v1039 = vadd.f32 0.0, %v1038
    %v1040 = vpop.f32.mrf.mxu0
    %v1041 = vpop.f32.mrf.mxu0
    %v1042 = vadd.f32 0.0, %v1041
    %v1043 = vpop.f32.mrf.mxu0
    %1044 = vdwg.mxu0
    %v1045 = vadd.f32 %v769, %v1039
    %v1046 = vadd.f32 %v772, %v1042
    %1047 = vrot.lane.b32.xlu0 %v233, 104
    %v1048 = vpop.permute.xlu0 %1047
    %1049 = vrot.lane.b32.xlu0 %v233, 72
    %v1050 = vpop.permute.xlu0 %1049
    %v1052 = vsel %vm238, %v1048, 0
    %v1055 = vsel %vm238, %v1050, 0
    %1057 = vmatprep.subr.bf16.mxu0 0
    %1058 = vmatpush1.bf16.xpose.msra.mxu0 0
    %1059 = vmatprep.subr.bf16.mxu0 0
    %1060 = vmatpush1.bf16.xpose.msra.mxu0 0
    %1061 = vmatprep.subr.bf16.mxu0 0
    %1062 = vmatpush1.bf16.xpose.msra.mxu0 0
    %1063 = vmatprep.subr.bf16.mxu0 0
    %1064 = vmatpush1.bf16.xpose.msra.mxu0 0
    %1065 = vmatprep.subr.bf16.mxu0 0
    %1066 = vmatpush1.bf16.xpose.msra.mxu0 0
    %1067 = vmatprep.subr.bf16.mxu0 0
    %1068 = vmatpush1.bf16.xpose.msra.mxu0 0
    %1069 = vmatprep.subr.bf16.mxu0 0
    %1070 = vmatpush1.bf16.xpose.msra.mxu0 0
    %1071 = vmatprep.subr.bf16.mxu0 0
    %1072 = vmatpush1.bf16.xpose.msra.mxu0 %v1055
    %1073 = vmatprep.subr.bf16.mxu0 0
    %1074 = vmatpush2.bf16.xpose.msra.mxu0 0
    %1075 = vmatprep.subr.bf16.mxu0 0
    %1076 = vmatpush2.bf16.xpose.msra.mxu0 0
    %1077 = vmatprep.subr.bf16.mxu0 0
    %1078 = vmatpush2.bf16.xpose.msra.mxu0 0
    %1079 = vmatprep.subr.bf16.mxu0 0
    %1080 = vmatpush2.bf16.xpose.msra.mxu0 0
    %1081 = vmatprep.subr.bf16.mxu0 0
    %1082 = vmatpush2.bf16.xpose.msra.mxu0 0
    %1083 = vmatprep.subr.bf16.mxu0 0
    %1084 = vmatpush2.bf16.xpose.msra.mxu0 0
    %1085 = vmatprep.subr.bf16.mxu0 0
    %1086 = vmatpush2.bf16.xpose.msra.mxu0 0
    %1087 = vmatprep.subr.bf16.mxu0 0
    %1088 = vmatpush2.bf16.xpose.msra.mxu0 0
    %1089 = vmatprep.mubr.bf16.mxu0 0
    %1090 = vmatmul.mubr.bf16.gmra.mxu0 %v1052
    %v1091 = vpop.f32.mrf.mxu0
    %v1092 = vadd.f32 0.0, %v1091
    %v1093 = vpop.f32.mrf.mxu0
    %v1094 = vpop.f32.mrf.mxu0
    %v1095 = vpop.f32.mrf.mxu0
    %1096 = vdwg.mxu0
    %1097 = vrot.lane.b32.xlu0 %v234, 104
    %v1098 = vpop.permute.xlu0 %1097
    %1099 = vrot.lane.b32.xlu0 %v234, 72
    %v1100 = vpop.permute.xlu0 %1099
    %v1102 = vsel %vm238, %v1098, 0
    %v1105 = vsel %vm238, %v1100, 0
    %1107 = vmatprep.subr.bf16.mxu0 0
    %1108 = vmatpush1.bf16.xpose.msra.mxu0 0
    %1109 = vmatprep.subr.bf16.mxu0 0
    %1110 = vmatpush1.bf16.xpose.msra.mxu0 0
    %1111 = vmatprep.subr.bf16.mxu0 0
    %1112 = vmatpush1.bf16.xpose.msra.mxu0 0
    %1113 = vmatprep.subr.bf16.mxu0 0
    %1114 = vmatpush1.bf16.xpose.msra.mxu0 0
    %1115 = vmatprep.subr.bf16.mxu0 0
    %1116 = vmatpush1.bf16.xpose.msra.mxu0 0
    %1117 = vmatprep.subr.bf16.mxu0 0
    %1118 = vmatpush1.bf16.xpose.msra.mxu0 0
    %1119 = vmatprep.subr.bf16.mxu0 0
    %1120 = vmatpush1.bf16.xpose.msra.mxu0 0
    %1121 = vmatprep.subr.bf16.mxu0 0
    %1122 = vmatpush1.bf16.xpose.msra.mxu0 %v1105
    %1123 = vmatprep.subr.bf16.mxu0 0
    %1124 = vmatpush2.bf16.xpose.msra.mxu0 0
    %1125 = vmatprep.subr.bf16.mxu0 0
    %1126 = vmatpush2.bf16.xpose.msra.mxu0 0
    %1127 = vmatprep.subr.bf16.mxu0 0
    %1128 = vmatpush2.bf16.xpose.msra.mxu0 0
    %1129 = vmatprep.subr.bf16.mxu0 0
    %1130 = vmatpush2.bf16.xpose.msra.mxu0 0
    %1131 = vmatprep.subr.bf16.mxu0 0
    %1132 = vmatpush2.bf16.xpose.msra.mxu0 0
    %1133 = vmatprep.subr.bf16.mxu0 0
    %1134 = vmatpush2.bf16.xpose.msra.mxu0 0
    %1135 = vmatprep.subr.bf16.mxu0 0
    %1136 = vmatpush2.bf16.xpose.msra.mxu0 0
    %1137 = vmatprep.subr.bf16.mxu0 0
    %1138 = vmatpush2.bf16.xpose.msra.mxu0 0
    %1139 = vmatprep.mubr.bf16.mxu0 0
    %1140 = vmatmul.mubr.bf16.gmra.mxu0 %v1102
    %v1141 = vpop.f32.mrf.mxu0
    %v1142 = vadd.f32 0.0, %v1141
    %v1143 = vpop.f32.mrf.mxu0
    %v1144 = vpop.f32.mrf.mxu0
    %v1145 = vpop.f32.mrf.mxu0
    %1146 = vdwg.mxu0
    %v1147 = vmul.f32 %v1092, 0.35355338
    %v1148 = vmul.f32 %v1142, 0.35355338
    %v1149 = vsel %vm238, %v1147, -inf
    %1150 = vmax.xlane.f32.xlu0 %v1149
    %v1151 = vpop.xlane.xlu0 %1150
    %v1152 = vsel %vm238, %v1148, -inf
    %1153 = vmax.xlane.f32.xlu0 %v1152
    %v1154 = vpop.xlane.xlu0 %1153
    %v1155 = vsub.f32 %v1147, %v1151
    %v1156 = vsub.f32 %v1148, %v1154
    %v1157 = vmul.f32 %v1155, 1.442695
    %v1158 = vpow.pop %v1157
    %v1159 = vmul.f32 %v1156, 1.442695
    %v1160 = vpow.pop %v1159
    %v1161 = vsel %vm238, %v1158, 0.0
    %1162 = vadd.xlane.f32.xlu0 %v1161
    %v1163 = vpop.xlane.xlu0 %1162
    %v1164 = vsel %vm238, %v1160, 0.0
    %1165 = vadd.xlane.f32.xlu0 %v1164
    %v1166 = vpop.xlane.xlu0 %1165
    %v1167 = vrcp.pop %v1163
    %v1168 = vrcp.pop %v1166
    %v1169 = vmul.f32 %v1158, %v1167
    %v1170 = vmul.f32 %v1160, %v1168
    %v1171 = vpack.c.bf16 %v1169, %v1169
    %v1172 = vpack.c.bf16 %v1170, %v1170
    %1173 = vrot.lane.b32.xlu0 %v233, 40
    %v1174 = vpop.permute.xlu0 %1173
    %v1176 = vsel %vm238, %v1171, 0
    %v1179 = vsel %vm365, %v1174, 0
    %1181 = vmatprep.subr.bf16.mxu0 0
    %1182 = vmatpush1.bf16.msra.mxu0 0
    %1183 = vmatprep.subr.bf16.mxu0 0
    %1184 = vmatpush1.bf16.msra.mxu0 0
    %1185 = vmatprep.subr.bf16.mxu0 0
    %1186 = vmatpush1.bf16.msra.mxu0 0
    %1187 = vmatprep.subr.bf16.mxu0 0
    %1188 = vmatpush1.bf16.msra.mxu0 0
    %1189 = vmatprep.subr.bf16.mxu0 0
    %1190 = vmatpush1.bf16.msra.mxu0 0
    %1191 = vmatprep.subr.bf16.mxu0 0
    %1192 = vmatpush1.bf16.msra.mxu0 0
    %1193 = vmatprep.subr.bf16.mxu0 0
    %1194 = vmatpush1.bf16.msra.mxu0 0
    %1195 = vmatprep.subr.bf16.mxu0 0
    %1196 = vmatpush1.bf16.msra.mxu0 %v1179
    %1197 = vmatprep.subr.bf16.mxu0 0
    %1198 = vmatpush2.bf16.msra.mxu0 0
    %1199 = vmatprep.subr.bf16.mxu0 0
    %1200 = vmatpush2.bf16.msra.mxu0 0
    %1201 = vmatprep.subr.bf16.mxu0 0
    %1202 = vmatpush2.bf16.msra.mxu0 0
    %1203 = vmatprep.subr.bf16.mxu0 0
    %1204 = vmatpush2.bf16.msra.mxu0 0
    %1205 = vmatprep.subr.bf16.mxu0 0
    %1206 = vmatpush2.bf16.msra.mxu0 0
    %1207 = vmatprep.subr.bf16.mxu0 0
    %1208 = vmatpush2.bf16.msra.mxu0 0
    %1209 = vmatprep.subr.bf16.mxu0 0
    %1210 = vmatpush2.bf16.msra.mxu0 0
    %1211 = vmatprep.subr.bf16.mxu0 0
    %1212 = vmatpush2.bf16.msra.mxu0 0
    %1213 = vmatprep.mubr.bf16.mxu0 0
    %1214 = vmatmul.mubr.bf16.gmra.mxu0 %v1176
    %v1215 = vpop.f32.mrf.mxu0
    %v1216 = vadd.f32 0.0, %v1215
    %v1217 = vpop.f32.mrf.mxu0
    %v1218 = vpop.f32.mrf.mxu0
    %v1219 = vpop.f32.mrf.mxu0
    %1220 = vdwg.mxu0
    %1221 = vrot.lane.b32.xlu0 %v234, 40
    %v1222 = vpop.permute.xlu0 %1221
    %v1224 = vsel %vm238, %v1172, 0
    %v1227 = vsel %vm365, %v1222, 0
    %1229 = vmatprep.subr.bf16.mxu0 0
    %1230 = vmatpush1.bf16.msra.mxu0 0
    %1231 = vmatprep.subr.bf16.mxu0 0
    %1232 = vmatpush1.bf16.msra.mxu0 0
    %1233 = vmatprep.subr.bf16.mxu0 0
    %1234 = vmatpush1.bf16.msra.mxu0 0
    %1235 = vmatprep.subr.bf16.mxu0 0
    %1236 = vmatpush1.bf16.msra.mxu0 0
    %1237 = vmatprep.subr.bf16.mxu0 0
    %1238 = vmatpush1.bf16.msra.mxu0 0
    %1239 = vmatprep.subr.bf16.mxu0 0
    %1240 = vmatpush1.bf16.msra.mxu0 0
    %1241 = vmatprep.subr.bf16.mxu0 0
    %1242 = vmatpush1.bf16.msra.mxu0 0
    %1243 = vmatprep.subr.bf16.mxu0 0
    %1244 = vmatpush1.bf16.msra.mxu0 %v1227
    %1245 = vmatprep.subr.bf16.mxu0 0
    %1246 = vmatpush2.bf16.msra.mxu0 0
    %1247 = vmatprep.subr.bf16.mxu0 0
    %1248 = vmatpush2.bf16.msra.mxu0 0
    %1249 = vmatprep.subr.bf16.mxu0 0
    %1250 = vmatpush2.bf16.msra.mxu0 0
    %1251 = vmatprep.subr.bf16.mxu0 0
    %1252 = vmatpush2.bf16.msra.mxu0 0
    %1253 = vmatprep.subr.bf16.mxu0 0
    %1254 = vmatpush2.bf16.msra.mxu0 0
    %1255 = vmatprep.subr.bf16.mxu0 0
    %1256 = vmatpush2.bf16.msra.mxu0 0
    %1257 = vmatprep.subr.bf16.mxu0 0
    %1258 = vmatpush2.bf16.msra.mxu0 0
    %1259 = vmatprep.subr.bf16.mxu0 0
    %1260 = vmatpush2.bf16.msra.mxu0 0
    %1261 = vmatprep.mubr.bf16.mxu0 0
    %1262 = vmatmul.mubr.bf16.gmra.mxu0 %v1224
    %v1263 = vpop.f32.mrf.mxu0
    %v1264 = vadd.f32 0.0, %v1263
    %v1265 = vpop.f32.mrf.mxu0
    %v1266 = vpop.f32.mrf.mxu0
    %v1267 = vpop.f32.mrf.mxu0
    %1268 = vdwg.mxu0
    %v1269 = vpack.c.bf16 %v1264, %v1216
    %v1271 = vsel %vm238, %v1269, 0
    %v1274 = vsel %vm365, %v116, 0
    %1276 = vmatprep.subr.bf16.mxu0 0
    %1277 = vmatpush1.bf16.msra.mxu0 0
    %1278 = vmatprep.subr.bf16.mxu0 0
    %1279 = vmatpush1.bf16.msra.mxu0 0
    %1280 = vmatprep.subr.bf16.mxu0 0
    %1281 = vmatpush1.bf16.msra.mxu0 0
    %1282 = vmatprep.subr.bf16.mxu0 0
    %1283 = vmatpush1.bf16.msra.mxu0 0
    %1284 = vmatprep.subr.bf16.mxu0 0
    %1285 = vmatpush1.bf16.msra.mxu0 0
    %1286 = vmatprep.subr.bf16.mxu0 0
    %1287 = vmatpush1.bf16.msra.mxu0 0
    %1288 = vmatprep.subr.bf16.mxu0 0
    %1289 = vmatpush1.bf16.msra.mxu0 0
    %1290 = vmatprep.subr.bf16.mxu0 0
    %1291 = vmatpush1.bf16.msra.mxu0 %v1274
    %1292 = vmatprep.subr.bf16.mxu0 0
    %1293 = vmatpush2.bf16.msra.mxu0 0
    %1294 = vmatprep.subr.bf16.mxu0 0
    %1295 = vmatpush2.bf16.msra.mxu0 0
    %1296 = vmatprep.subr.bf16.mxu0 0
    %1297 = vmatpush2.bf16.msra.mxu0 0
    %1298 = vmatprep.subr.bf16.mxu0 0
    %1299 = vmatpush2.bf16.msra.mxu0 0
    %1300 = vmatprep.subr.bf16.mxu0 0
    %1301 = vmatpush2.bf16.msra.mxu0 0
    %1302 = vmatprep.subr.bf16.mxu0 0
    %1303 = vmatpush2.bf16.msra.mxu0 0
    %1304 = vmatprep.subr.bf16.mxu0 0
    %1305 = vmatpush2.bf16.msra.mxu0 0
    %1306 = vmatprep.subr.bf16.mxu0 0
    %1307 = vmatpush2.bf16.msra.mxu0 0
    %1308 = vmatprep.mubr.bf16.mxu0 0
    %1309 = vmatmul.mubr.bf16.gmra.mxu0 %v1271
    %v1310 = vpop.f32.mrf.mxu0
    %v1311 = vadd.f32 0.0, %v1310
    %v1312 = vpop.f32.mrf.mxu0
    %v1313 = vpop.f32.mrf.mxu0
    %v1314 = vadd.f32 0.0, %v1313
    %v1315 = vpop.f32.mrf.mxu0
    %1316 = vdwg.mxu0
    %v1317 = vadd.f32 %v1045, %v1311
    %v1318 = vadd.f32 %v1046, %v1314
    %v1320 = vlaneseq
    %v1321 = vshrl.u32 %v1320, 7
    %v1322 = vsub.s32 0, %v1321
    %v1323 = vrot.slane %v117, %v1322
    %v1325 = vadd.f32 %v1317, %v1323
    %v1326 = vadd.f32 %v1318, %v1323
    %v1327 = vadd.f32 %v103, %v1325
    %v1328 = vadd.f32 %v104, %v1326
    %v1329 = vsel %vm132, %v1327, 0.0
    %1330 = vadd.xlane.f32.xlu0 %v1329
    %v1331 = vpop.xlane.xlu0 %1330
    %v1332 = vsel %vm132, %v1328, 0.0
    %1333 = vadd.xlane.f32.xlu0 %v1332
    %v1334 = vpop.xlane.xlu0 %1333
    %v1335 = vmul.f32 %v1331, %v139
    %v1336 = vmul.f32 %v1334, %v139
    %v1337 = vsub.f32 %v1327, %v1335
    %v1338 = vsub.f32 %v1328, %v1336
    %v1339 = vmul.f32 %v1337, %v1337
    %v1340 = vmul.f32 %v1338, %v1338
    %v1341 = vsel %vm132, %v1339, 0.0
    %1342 = vadd.xlane.f32.xlu0 %v1341
    %v1343 = vpop.xlane.xlu0 %1342
    %v1344 = vsel %vm132, %v1340, 0.0
    %1345 = vadd.xlane.f32.xlu0 %v1344
    %v1346 = vpop.xlane.xlu0 %1345
    %v1347 = vmul.f32 %v1343, %v139
    %v1348 = vmul.f32 %v1346, %v139
    %v1349 = vadd.f32 %v1347, 1e-05
    %v1350 = vadd.f32 %v1348, 1e-05
    %v1351 = vrsqrt.pop %v1349
    %v1352 = vrsqrt.pop %v1350
    %v1353 = vmul.f32 %v1337, %v1351
    %v1354 = vmul.f32 %v1338, %v1352
    %v1356 = vlaneseq
    %v1357 = vshrl.u32 %v1356, 7
    %v1358 = vsub.s32 0, %v1357
    %v1359 = vrot.slane %v107, %v1358
    %v1361 = vmul.f32 %v1353, %v1359
    %v1362 = vmul.f32 %v1354, %v1359
    %v1364 = vlaneseq
    %v1365 = vshrl.u32 %v1364, 7
    %v1366 = vsub.s32 0, %v1365
    %v1367 = vrot.slane %v108, %v1366
    %v1369 = vadd.f32 %v1361, %v1367
    %v1370 = vadd.f32 %v1362, %v1367
    %v1371 = vpack.c.bf16 %v1370, %v1369
    %v1373 = vlaneseq
    %v1374 = vshrl.u32 %v1373, 7
    %v1375 = vsub.s32 0, %v1374
    %v1376 = vrot.slane %v122, %v1375
    %v1382 = vunpack.c.l.b16 %v118
    %v1383 = vunpack.c.l.b16 %v119
    %v1384 = vunpack.c.l.b16 %v120
    %v1385 = vunpack.c.l.b16 %v121
    %v1386 = vpack.c.b16 %v1383, %v1382
    %v1387 = vpack.c.b16 %v1385, %v1384
    %v1391 = vsel %vm132, %v1371, 0
    %1393 = vmatprep.subr.bf16.mxu0 0
    %1394 = vmatpush1.bf16.msra.mxu0 0
    %1395 = vmatprep.subr.bf16.mxu0 0
    %1396 = vmatpush1.bf16.msra.mxu0 0
    %1397 = vmatprep.subr.bf16.mxu0 0
    %1398 = vmatpush1.bf16.msra.mxu0 0
    %1399 = vmatprep.subr.bf16.mxu0 0
    %1400 = vmatpush1.bf16.msra.mxu0 0
    %1401 = vmatprep.subr.bf16.mxu0 0
    %1402 = vmatpush1.bf16.msra.mxu0 0
    %1403 = vmatprep.subr.bf16.mxu0 0
    %1404 = vmatpush1.bf16.msra.mxu0 0
    %1405 = vmatprep.subr.bf16.mxu0 0
    %1406 = vmatpush1.bf16.msra.mxu0 %v1387
    %1407 = vmatprep.subr.bf16.mxu0 0
    %1408 = vmatpush1.bf16.msra.mxu0 %v1386
    %1409 = vmatprep.subr.bf16.mxu0 0
    %1410 = vmatpush2.bf16.msra.mxu0 0
    %1411 = vmatprep.subr.bf16.mxu0 0
    %1412 = vmatpush2.bf16.msra.mxu0 0
    %1413 = vmatprep.subr.bf16.mxu0 0
    %1414 = vmatpush2.bf16.msra.mxu0 0
    %1415 = vmatprep.subr.bf16.mxu0 0
    %1416 = vmatpush2.bf16.msra.mxu0 0
    %1417 = vmatprep.subr.bf16.mxu0 0
    %1418 = vmatpush2.bf16.msra.mxu0 0
    %1419 = vmatprep.subr.bf16.mxu0 0
    %1420 = vmatpush2.bf16.msra.mxu0 0
    %1421 = vmatprep.subr.bf16.mxu0 0
    %1422 = vmatpush2.bf16.msra.mxu0 0
    %1423 = vmatprep.subr.bf16.mxu0 0
    %1424 = vmatpush2.bf16.msra.mxu0 0
    %1425 = vmatprep.mubr.bf16.mxu0 0
    %1426 = vmatmul.mubr.bf16.gmra.mxu0 %v1391
    %v1427 = vpop.f32.mrf.mxu0
    %v1428 = vadd.f32 %v1376, %v1427
    %v1429 = vpop.f32.mrf.mxu0
    %v1430 = vpop.f32.mrf.mxu0
    %v1431 = vadd.f32 %v1376, %v1430
    %v1432 = vpop.f32.mrf.mxu0
    %1433 = vdwg.mxu0
    %v1434 = vmul.f32 %v1428, 0.5
    %v1435 = vmul.f32 %v1431, 0.5
    %v1436 = vrcp.pop 1.4142135
    %v1437 = vmul.f32 %v1428, %v1436
    %v1438 = vmul.f32 %v1431, %v1436
    %v1439 = verf.f32.pop %v1437
    %v1440 = verf.f32.pop %v1438
    %v1441 = vadd.f32 %v1439, 1.0
    %v1442 = vadd.f32 %v1440, 1.0
    %v1443 = vmul.f32 %v1434, %v1441
    %v1444 = vmul.f32 %v1435, %v1442
    %v1445 = vpack.c.bf16 %v1444, %v1443
    %v1447 = vlaneseq
    %v1448 = vshrl.u32 %v1447, 7
    %v1449 = vsub.s32 0, %v1448
    %v1450 = vrot.slane %v131, %v1449
    %v1460 = vunpack.c.l.b16 %v123
    %v1461 = vunpack.c.l.b16 %v124
    %v1462 = vunpack.c.l.b16 %v125
    %v1463 = vunpack.c.l.b16 %v126
    %v1464 = vunpack.c.l.b16 %v127
    %v1465 = vunpack.c.l.b16 %v128
    %v1466 = vunpack.c.l.b16 %v129
    %v1467 = vunpack.c.l.b16 %v130
    %v1468 = vpack.c.b16 %v1461, %v1460
    %v1469 = vpack.c.b16 %v1463, %v1462
    %v1470 = vpack.c.b16 %v1465, %v1464
    %v1471 = vpack.c.b16 %v1467, %v1466
    %vm1476 = vcmask 523264
    %v1478 = vsel %vm1476, %v1445, 0
    %1480 = vmatprep.subr.bf16.mxu0 0
    %1481 = vmatpush1.bf16.msra.mxu0 0
    %1482 = vmatprep.subr.bf16.mxu0 0
    %1483 = vmatpush1.bf16.msra.mxu0 0
    %1484 = vmatprep.subr.bf16.mxu0 0
    %1485 = vmatpush1.bf16.msra.mxu0 0
    %1486 = vmatprep.subr.bf16.mxu0 0
    %1487 = vmatpush1.bf16.msra.mxu0 0
    %1488 = vmatprep.subr.bf16.mxu0 0
    %1489 = vmatpush1.bf16.msra.mxu0 %v1471
    %1490 = vmatprep.subr.bf16.mxu0 0
    %1491 = vmatpush1.bf16.msra.mxu0 %v1470
    %1492 = vmatprep.subr.bf16.mxu0 0
    %1493 = vmatpush1.bf16.msra.mxu0 %v1469
    %1494 = vmatprep.subr.bf16.mxu0 0
    %1495 = vmatpush1.bf16.msra.mxu0 %v1468
    %1496 = vmatprep.subr.bf16.mxu0 0
    %1497 = vmatpush2.bf16.msra.mxu0 0
    %1498 = vmatprep.subr.bf16.mxu0 0
    %1499 = vmatpush2.bf16.msra.mxu0 0
    %1500 = vmatprep.subr.bf16.mxu0 0
    %1501 = vmatpush2.bf16.msra.mxu0 0
    %1502 = vmatprep.subr.bf16.mxu0 0
    %1503 = vmatpush2.bf16.msra.mxu0 0
    %1504 = vmatprep.subr.bf16.mxu0 0
    %1505 = vmatpush2.bf16.msra.mxu0 0
    %1506 = vmatprep.subr.bf16.mxu0 0
    %1507 = vmatpush2.bf16.msra.mxu0 0
    %1508 = vmatprep.subr.bf16.mxu0 0
    %1509 = vmatpush2.bf16.msra.mxu0 0
    %1510 = vmatprep.subr.bf16.mxu0 0
    %1511 = vmatpush2.bf16.msra.mxu0 0
    %1512 = vmatprep.mubr.bf16.mxu0 0
    %1513 = vmatmul.mubr.bf16.gmra.mxu0 %v1478
    %v1514 = vpop.f32.mrf.mxu0
    %v1515 = vadd.f32 %v1450, %v1514
    %v1516 = vpop.f32.mrf.mxu0
    %v1517 = vpop.f32.mrf.mxu0
    %v1518 = vadd.f32 %v1450, %v1517
    %v1519 = vpop.f32.mrf.mxu0
    %1520 = vdwg.mxu0
    %v1521 = vadd.f32 %v1369, %v1515
    %v1522 = vadd.f32 %v1370, %v1518
    %1523 = vst.msk [vmem:[#allocation11] sm:$0xff] %vm132, %v1521
    %1524 = vst.msk [vmem:[#allocation11 + $0x8] sm:$0xff] %vm132, %v1522
    // Predicated region
    $region70: #{tpu_custom_call.1} parent=1 // pred_check
      _
    $region71: #{tpu_custom_call.1} parent=1 // pred_check_branch
      %1526 = sbr.rel (0) target = $region73
    $region72: #{tpu_custom_call.1} parent=1 // pred_region
      %s1528 = ssub.s32 256, 256
      %1529 = vsyncadd [#allocation4], %s1528
      %s1530 = sshll.u32 [#allocation11], 4
      %s1531 = int_to_ptr.vmem [resolvable:$true] %s1530
      %1536 = dma.vmem_to_hbm [thread:$0]  %s1531, 256, %s12, [#allocation4], 128, 128, 8
    $region73: #{tpu_custom_call.1} parent=1 // pred_fallthru
      _
    // Predicated region
    $region74: #{tpu_custom_call.1} parent=1 // pred_check
      _
    $region75: #{tpu_custom_call.1} parent=1 // pred_check_branch
      %1538 = sbr.rel (0) target = $region77
    $region76: #{tpu_custom_call.1} parent=1 // pred_region
      %1539 = dma.done [#allocation4], 256
    $region77: #{tpu_custom_call.1} parent=1 // pred_fallthru
      _
    %1540 = vsyncpa [#allocation3], 1
    %1541 = vsyncpa [#allocation6], 1
    %1542 = vsyncpa [#allocation9], 1
    %1543 = vsyncpa [#allocation4], 1

</llo_original>
